<compile_context>
chip_gen: v5e
topology: v5e:2x2
jax: 0.10.0
libtpu: 0.0.40
codegen_flags: <defaults>
</compile_context>

<pallas_src>
import jax
import jax.numpy as jnp
import numpy as np
from jax.experimental import pallas as pl
from jax.experimental.pallas import tpu as pltpu


def _make_bert_embedding_kernel(unroll_gather):
    """Build the kernel; `unroll_gather` picks static unroll vs pl.loop for the gather."""

    def bert_embedding_kernel(ids_ref,       # SMEM  (B, S) int32       (scalar prefetch)
                              seg_lab_ref,   # VMEM  (TILE_S, 1) int32
                              tok_hbm_ref,   # HBM   (V, E)             (memory_space=ANY)
                              seg_tbl_ref,   # VMEM  (NS, E)
                              pos_ref,       # VMEM  (TILE_S, E)
                              out_ref,       # VMEM  (TILE_S, E)
                              tok_buf,       # VMEM scratch (TILE_S, E) f32
                              sems):         # DMA semaphores (TILE_S,)
        si = pl.program_id(0)                # seq-tile index (outer grid axis)
        b = pl.program_id(1)                 # batch index (inner grid axis)
        TILE_S, E = tok_buf.shape
        V = tok_hbm_ref.shape[0]
        NS = seg_tbl_ref.shape[0]
        s_base = si * TILE_S

        # ---- 1) Issue per-row gather DMAs from the HBM token table (ids from SMEM). ----
        # NOTE: HBM/VMEM refs have no runtime OOB check, so ids are clamped defensively.
        def issue_row(t):
            row = jnp.clip(ids_ref[b, s_base + t], 0, V - 1)
            pltpu.make_async_copy(
                tok_hbm_ref.at[pl.ds(row, 1), :],
                tok_buf.at[pl.ds(t, 1), :],
                sems.at[t],
            ).start()

        def wait_row(t):
            pltpu.make_async_copy(
                tok_hbm_ref.at[pl.ds(0, 1), :],   # placeholder src (shape bookkeeping only)
                tok_buf.at[pl.ds(t, 1), :],
                sems.at[t],
            ).wait()

        if unroll_gather:
            for t in range(TILE_S):
                issue_row(t)
        else:
            pl.loop(0, TILE_S)(issue_row)

        # ---- 2) Segment + positional embedding on the VPU while the DMAs are in flight. ----
        segs_col = seg_lab_ref[...]                                   # (TILE_S, 1) int32
        base = pos_ref[...].astype(jnp.float32)                       # (TILE_S, E)
        for k in range(NS):                                           # NS is tiny (e.g. 3)
            row_k = seg_tbl_ref[k:k + 1, :].astype(jnp.float32)       # (1, E)
            base = base + jnp.where(segs_col == k, row_k, 0.0)        # (TILE_S, E)

        # ---- 3) Wait on the gathered rows, one vectorized add, lane-dense store. ----
        if unroll_gather:
            for t in range(TILE_S):
                wait_row(t)
        else:
            pl.loop(0, TILE_S)(wait_row)

        out_ref[...] = (tok_buf[...].astype(jnp.float32) + base).astype(out_ref.dtype)

    return bert_embedding_kernel


def _pick_tile_s(S, max_tile=256):
    """Largest seq tile <= max_tile that divides S (multiple of 8 when possible)."""
    if S <= max_tile:
        return S
    for t in range(max_tile - (max_tile % 8), 7, -8):
        if S % t == 0:
            return t
    return S


def bert_embedding(token_ids, segment_labels, tok_table, seg_table, pos_table):
    B, S = token_ids.shape
    V, E = tok_table.shape
    NS = seg_table.shape[0]

    TILE_S = _pick_tile_s(S)
    num_s_tiles = S // TILE_S

    token_ids = token_ids.astype(jnp.int32)
    # Flat (B*S, 1) labels: the kernel receives a (TILE_S, 1) column directly
    # (token index on sublanes), avoiding an in-kernel lane->sublane relayout.
    seg_lab_2d = segment_labels.astype(jnp.int32).reshape(B * S, 1)

    def flat_block(si, b, ids):            # flat token-tile index for (B*S, ...) arrays
        return (b * num_s_tiles + si, 0)

    grid_spec = pltpu.PrefetchScalarGridSpec(
        num_scalar_prefetch=1,             # token_ids -> SMEM, drives the DMA gather
        grid=(num_s_tiles, B),             # seq tiles outer -> pos tile reused across B
        in_specs=[
            pl.BlockSpec((TILE_S, 1), flat_block),                  # segment labels
            pl.BlockSpec(memory_space=pl.ANY),                      # token table (HBM)
            pl.BlockSpec((NS, E), lambda si, b, ids: (0, 0)),       # segment table
            pl.BlockSpec((TILE_S, E), lambda si, b, ids: (si, 0)),  # positional rows
        ],
        out_specs=pl.BlockSpec((TILE_S, E), flat_block),            # lane-dense output
        scratch_shapes=[
            pltpu.VMEM((TILE_S, E), jnp.float32),                   # gathered token rows
            pltpu.SemaphoreType.DMA((TILE_S,)),                     # one sem per row DMA
        ],
    )

    itemsize = jnp.dtype(tok_table.dtype).itemsize
    cost = pl.CostEstimate(
        flops=2 * B * S * E,               # two adds per output element
        transcendentals=0,
        bytes_accessed=(B * S * E * itemsize)      # token gather reads
                       + (B * S * E * 4)           # output writes (f32)
                       + (S * E * itemsize)        # positional rows
                       + (NS * E * itemsize)       # segment table
                       + (B * S * 8),              # ids + segment labels
    )

    kernel = _make_bert_embedding_kernel(unroll_gather=(TILE_S <= 64))

    out_flat = pl.pallas_call(
        kernel,
        out_shape=jax.ShapeDtypeStruct((B * S, E), jnp.float32),
        grid_spec=grid_spec,
        compiler_params=pltpu.CompilerParams(
            dimension_semantics=("parallel", "parallel")),
        cost_estimate=cost,
    )(token_ids, seg_lab_2d, tok_table, seg_table, pos_table)

    return out_flat.reshape(B, S, E)


def make_sinusoidal_pe(max_len, d_model):
    pos = np.arange(max_len, dtype=np.float32)[:, None]               # (L, 1)
    div = np.exp(np.arange(0, d_model, 2, dtype=np.float32)
                 * -(np.log(10000.0) / d_model))                      # (E/2,)
    pe = np.zeros((max_len, d_model), dtype=np.float32)
    pe[:, 0::2] = np.sin(pos * div)
    pe[:, 1::2] = np.cos(pos * div)
    return jnp.asarray(pe)


if __name__ == "__main__":
    # small synthetic config (production: bf16 tables halve HBM traffic on v6e/v7x)
    vocab_size = 64
    embed_size = 32
    max_seq_len = 32
    num_segments = 3
    batch, seq = 2, 8

    key = jax.random.PRNGKey(0)
    k_tok, k_seg, k_ids, k_lab = jax.random.split(key, 4)

    # nn.Embedding-style init; padding_idx=0 rows zeroed (forward just reads the zero row)
    tok_table = jax.random.normal(k_tok, (vocab_size, embed_size), jnp.float32)
    tok_table = tok_table.at[0].set(0.0)
    seg_table = jax.random.normal(k_seg, (num_segments, embed_size), jnp.float32)
    seg_table = seg_table.at[0].set(0.0)
    pos_table = make_sinusoidal_pe(max_seq_len, embed_size)

    token_ids = jax.random.randint(k_ids, (batch, seq), 0, vocab_size, jnp.int32)
    segment_labels = jax.random.randint(k_lab, (batch, seq), 0, num_segments, jnp.int32)

    out = bert_embedding(token_ids, segment_labels, tok_table, seg_table, pos_table)
    out = jax.block_until_ready(out)

    # plain-JAX reference for the forward pass
    ref = (tok_table[token_ids]
           + pos_table[:seq][None, :, :]
           + seg_table[segment_labels])
    assert out.shape == (batch, seq, embed_size)
    assert jnp.allclose(out, ref, atol=1e-5, rtol=1e-5)

    print("KERNEL_OK")
</pallas_src>

<mosaic_0001>
module attributes {stable_mosaic.version = 11 : i64} {
  func.func @bert_embedding_kernel(%arg0: i32, %arg1: i32, %arg2: memref<2x8xi32, #tpu.memory_space<smem>>, %arg3: memref<8x1xi32, #tpu.memory_space<vmem>>, %arg4: memref<64x32xf32, #tpu.memory_space<any>>, %arg5: memref<3x32xf32, #tpu.memory_space<vmem>>, %arg6: memref<8x32xf32, #tpu.memory_space<vmem>>, %arg7: memref<8x32xf32, #tpu.memory_space<vmem>>, %arg8: memref<8x32xf32, #tpu.memory_space<vmem>>, %arg9: memref<8x!tpu.dma_semaphore, #tpu.memory_space<semaphore_mem>>) attributes {dimension_semantics = [#tpu.dimension_semantics<parallel>, #tpu.dimension_semantics<parallel>], iteration_bounds = array<i64: 1, 2>, scalar_prefetch = 1 : i64, scratch_operands = 2 : i64, tpu.core_type = #tpu.core_type<tc>, window_params = [{transform_indices = @transform_0, window_bounds = array<i64: 8, 1>}, {}, {pipeline_mode = #tpu.pipeline_mode<synchronous>, transform_indices = @transform_2, window_bounds = array<i64: 3, 32>}, {transform_indices = @transform_3, window_bounds = array<i64: 8, 32>}, {transform_indices = @transform_4, window_bounds = array<i64: 8, 32>}]} {
    %c8_i32 = arith.constant 8 : i32
    %0 = arith.muli %arg0, %c8_i32 : i32
    %c0_i32 = arith.constant 0 : i32
    %1 = arith.addi %0, %c0_i32 : i32
    %2 = arith.index_cast %arg1 : i32 to index
    %3 = arith.index_cast %1 : i32 to index
    %4 = memref.load %arg2[%2, %3] : memref<2x8xi32, #tpu.memory_space<smem>>
    %c0_i32_0 = arith.constant 0 : i32
    %c63_i32 = arith.constant 63 : i32
    %5 = arith.maxsi %c0_i32_0, %4 : i32
    %6 = arith.minsi %c63_i32, %5 : i32
    %c0_i32_1 = arith.constant 0 : i32
    %c0_i32_2 = arith.constant 0 : i32
    %7 = tpu.memref_slice %arg4[%6, %c0_i32_2] : memref<64x32xf32, #tpu.memory_space<any>> -> memref<1x32xf32, #tpu.memory_space<any>>
    %c0_i32_3 = arith.constant 0 : i32
    %c0_i32_4 = arith.constant 0 : i32
    %8 = tpu.memref_slice %arg8[%c0_i32_3, %c0_i32_4] : memref<8x32xf32, #tpu.memory_space<vmem>> -> memref<1x32xf32, #tpu.memory_space<vmem>>
    %9 = tpu.memref_slice %arg9[%c0_i32_1] : memref<8x!tpu.dma_semaphore, #tpu.memory_space<semaphore_mem>> -> memref<1x!tpu.dma_semaphore, #tpu.memory_space<semaphore_mem>>
    %10 = tpu.memref_squeeze %9 : memref<1x!tpu.dma_semaphore, #tpu.memory_space<semaphore_mem>> -> memref<!tpu.dma_semaphore, #tpu.memory_space<semaphore_mem>>
    tpu.enqueue_dma source(%7 : memref<1x32xf32, #tpu.memory_space<any>>) target(%8 : memref<1x32xf32, #tpu.memory_space<vmem>>) target_semaphore(%10 : memref<!tpu.dma_semaphore, #tpu.memory_space<semaphore_mem>>)
    %c1_i32 = arith.constant 1 : i32
    %11 = arith.addi %0, %c1_i32 : i32
    %12 = arith.index_cast %arg1 : i32 to index
    %13 = arith.index_cast %11 : i32 to index
    %14 = memref.load %arg2[%12, %13] : memref<2x8xi32, #tpu.memory_space<smem>>
    %c0_i32_5 = arith.constant 0 : i32
    %c63_i32_6 = arith.constant 63 : i32
    %15 = arith.maxsi %c0_i32_5, %14 : i32
    %16 = arith.minsi %c63_i32_6, %15 : i32
    %c1_i32_7 = arith.constant 1 : i32
    %c0_i32_8 = arith.constant 0 : i32
    %17 = tpu.memref_slice %arg4[%16, %c0_i32_8] : memref<64x32xf32, #tpu.memory_space<any>> -> memref<1x32xf32, #tpu.memory_space<any>>
    %c1_i32_9 = arith.constant 1 : i32
    %c0_i32_10 = arith.constant 0 : i32
    %18 = tpu.memref_slice %arg8[%c1_i32_9, %c0_i32_10] : memref<8x32xf32, #tpu.memory_space<vmem>> -> memref<1x32xf32, #tpu.memory_space<vmem>>
    %19 = tpu.memref_slice %arg9[%c1_i32_7] : memref<8x!tpu.dma_semaphore, #tpu.memory_space<semaphore_mem>> -> memref<1x!tpu.dma_semaphore, #tpu.memory_space<semaphore_mem>>
    %20 = tpu.memref_squeeze %19 : memref<1x!tpu.dma_semaphore, #tpu.memory_space<semaphore_mem>> -> memref<!tpu.dma_semaphore, #tpu.memory_space<semaphore_mem>>
    tpu.enqueue_dma source(%17 : memref<1x32xf32, #tpu.memory_space<any>>) target(%18 : memref<1x32xf32, #tpu.memory_space<vmem>>) target_semaphore(%20 : memref<!tpu.dma_semaphore, #tpu.memory_space<semaphore_mem>>)
    %c2_i32 = arith.constant 2 : i32
    %21 = arith.addi %0, %c2_i32 : i32
    %22 = arith.index_cast %arg1 : i32 to index
    %23 = arith.index_cast %21 : i32 to index
    %24 = memref.load %arg2[%22, %23] : memref<2x8xi32, #tpu.memory_space<smem>>
    %c0_i32_11 = arith.constant 0 : i32
    %c63_i32_12 = arith.constant 63 : i32
    %25 = arith.maxsi %c0_i32_11, %24 : i32
    %26 = arith.minsi %c63_i32_12, %25 : i32
    %c2_i32_13 = arith.constant 2 : i32
    %c0_i32_14 = arith.constant 0 : i32
    %27 = tpu.memref_slice %arg4[%26, %c0_i32_14] : memref<64x32xf32, #tpu.memory_space<any>> -> memref<1x32xf32, #tpu.memory_space<any>>
    %c2_i32_15 = arith.constant 2 : i32
    %c0_i32_16 = arith.constant 0 : i32
    %28 = tpu.memref_slice %arg8[%c2_i32_15, %c0_i32_16] : memref<8x32xf32, #tpu.memory_space<vmem>> -> memref<1x32xf32, #tpu.memory_space<vmem>>
    %29 = tpu.memref_slice %arg9[%c2_i32_13] : memref<8x!tpu.dma_semaphore, #tpu.memory_space<semaphore_mem>> -> memref<1x!tpu.dma_semaphore, #tpu.memory_space<semaphore_mem>>
    %30 = tpu.memref_squeeze %29 : memref<1x!tpu.dma_semaphore, #tpu.memory_space<semaphore_mem>> -> memref<!tpu.dma_semaphore, #tpu.memory_space<semaphore_mem>>
    tpu.enqueue_dma source(%27 : memref<1x32xf32, #tpu.memory_space<any>>) target(%28 : memref<1x32xf32, #tpu.memory_space<vmem>>) target_semaphore(%30 : memref<!tpu.dma_semaphore, #tpu.memory_space<semaphore_mem>>)
    %c3_i32 = arith.constant 3 : i32
    %31 = arith.addi %0, %c3_i32 : i32
    %32 = arith.index_cast %arg1 : i32 to index
    %33 = arith.index_cast %31 : i32 to index
    %34 = memref.load %arg2[%32, %33] : memref<2x8xi32, #tpu.memory_space<smem>>
    %c0_i32_17 = arith.constant 0 : i32
    %c63_i32_18 = arith.constant 63 : i32
    %35 = arith.maxsi %c0_i32_17, %34 : i32
    %36 = arith.minsi %c63_i32_18, %35 : i32
    %c3_i32_19 = arith.constant 3 : i32
    %c0_i32_20 = arith.constant 0 : i32
    %37 = tpu.memref_slice %arg4[%36, %c0_i32_20] : memref<64x32xf32, #tpu.memory_space<any>> -> memref<1x32xf32, #tpu.memory_space<any>>
    %c3_i32_21 = arith.constant 3 : i32
    %c0_i32_22 = arith.constant 0 : i32
    %38 = tpu.memref_slice %arg8[%c3_i32_21, %c0_i32_22] : memref<8x32xf32, #tpu.memory_space<vmem>> -> memref<1x32xf32, #tpu.memory_space<vmem>>
    %39 = tpu.memref_slice %arg9[%c3_i32_19] : memref<8x!tpu.dma_semaphore, #tpu.memory_space<semaphore_mem>> -> memref<1x!tpu.dma_semaphore, #tpu.memory_space<semaphore_mem>>
    %40 = tpu.memref_squeeze %39 : memref<1x!tpu.dma_semaphore, #tpu.memory_space<semaphore_mem>> -> memref<!tpu.dma_semaphore, #tpu.memory_space<semaphore_mem>>
    tpu.enqueue_dma source(%37 : memref<1x32xf32, #tpu.memory_space<any>>) target(%38 : memref<1x32xf32, #tpu.memory_space<vmem>>) target_semaphore(%40 : memref<!tpu.dma_semaphore, #tpu.memory_space<semaphore_mem>>)
    %c4_i32 = arith.constant 4 : i32
    %41 = arith.addi %0, %c4_i32 : i32
    %42 = arith.index_cast %arg1 : i32 to index
    %43 = arith.index_cast %41 : i32 to index
    %44 = memref.load %arg2[%42, %43] : memref<2x8xi32, #tpu.memory_space<smem>>
    %c0_i32_23 = arith.constant 0 : i32
    %c63_i32_24 = arith.constant 63 : i32
    %45 = arith.maxsi %c0_i32_23, %44 : i32
    %46 = arith.minsi %c63_i32_24, %45 : i32
    %c4_i32_25 = arith.constant 4 : i32
    %c0_i32_26 = arith.constant 0 : i32
    %47 = tpu.memref_slice %arg4[%46, %c0_i32_26] : memref<64x32xf32, #tpu.memory_space<any>> -> memref<1x32xf32, #tpu.memory_space<any>>
    %c4_i32_27 = arith.constant 4 : i32
    %c0_i32_28 = arith.constant 0 : i32
    %48 = tpu.memref_slice %arg8[%c4_i32_27, %c0_i32_28] : memref<8x32xf32, #tpu.memory_space<vmem>> -> memref<1x32xf32, #tpu.memory_space<vmem>>
    %49 = tpu.memref_slice %arg9[%c4_i32_25] : memref<8x!tpu.dma_semaphore, #tpu.memory_space<semaphore_mem>> -> memref<1x!tpu.dma_semaphore, #tpu.memory_space<semaphore_mem>>
    %50 = tpu.memref_squeeze %49 : memref<1x!tpu.dma_semaphore, #tpu.memory_space<semaphore_mem>> -> memref<!tpu.dma_semaphore, #tpu.memory_space<semaphore_mem>>
    tpu.enqueue_dma source(%47 : memref<1x32xf32, #tpu.memory_space<any>>) target(%48 : memref<1x32xf32, #tpu.memory_space<vmem>>) target_semaphore(%50 : memref<!tpu.dma_semaphore, #tpu.memory_space<semaphore_mem>>)
    %c5_i32 = arith.constant 5 : i32
    %51 = arith.addi %0, %c5_i32 : i32
    %52 = arith.index_cast %arg1 : i32 to index
    %53 = arith.index_cast %51 : i32 to index
    %54 = memref.load %arg2[%52, %53] : memref<2x8xi32, #tpu.memory_space<smem>>
    %c0_i32_29 = arith.constant 0 : i32
    %c63_i32_30 = arith.constant 63 : i32
    %55 = arith.maxsi %c0_i32_29, %54 : i32
    %56 = arith.minsi %c63_i32_30, %55 : i32
    %c5_i32_31 = arith.constant 5 : i32
    %c0_i32_32 = arith.constant 0 : i32
    %57 = tpu.memref_slice %arg4[%56, %c0_i32_32] : memref<64x32xf32, #tpu.memory_space<any>> -> memref<1x32xf32, #tpu.memory_space<any>>
    %c5_i32_33 = arith.constant 5 : i32
    %c0_i32_34 = arith.constant 0 : i32
    %58 = tpu.memref_slice %arg8[%c5_i32_33, %c0_i32_34] : memref<8x32xf32, #tpu.memory_space<vmem>> -> memref<1x32xf32, #tpu.memory_space<vmem>>
    %59 = tpu.memref_slice %arg9[%c5_i32_31] : memref<8x!tpu.dma_semaphore, #tpu.memory_space<semaphore_mem>> -> memref<1x!tpu.dma_semaphore, #tpu.memory_space<semaphore_mem>>
    %60 = tpu.memref_squeeze %59 : memref<1x!tpu.dma_semaphore, #tpu.memory_space<semaphore_mem>> -> memref<!tpu.dma_semaphore, #tpu.memory_space<semaphore_mem>>
    tpu.enqueue_dma source(%57 : memref<1x32xf32, #tpu.memory_space<any>>) target(%58 : memref<1x32xf32, #tpu.memory_space<vmem>>) target_semaphore(%60 : memref<!tpu.dma_semaphore, #tpu.memory_space<semaphore_mem>>)
    %c6_i32 = arith.constant 6 : i32
    %61 = arith.addi %0, %c6_i32 : i32
    %62 = arith.index_cast %arg1 : i32 to index
    %63 = arith.index_cast %61 : i32 to index
    %64 = memref.load %arg2[%62, %63] : memref<2x8xi32, #tpu.memory_space<smem>>
    %c0_i32_35 = arith.constant 0 : i32
    %c63_i32_36 = arith.constant 63 : i32
    %65 = arith.maxsi %c0_i32_35, %64 : i32
    %66 = arith.minsi %c63_i32_36, %65 : i32
    %c6_i32_37 = arith.constant 6 : i32
    %c0_i32_38 = arith.constant 0 : i32
    %67 = tpu.memref_slice %arg4[%66, %c0_i32_38] : memref<64x32xf32, #tpu.memory_space<any>> -> memref<1x32xf32, #tpu.memory_space<any>>
    %c6_i32_39 = arith.constant 6 : i32
    %c0_i32_40 = arith.constant 0 : i32
    %68 = tpu.memref_slice %arg8[%c6_i32_39, %c0_i32_40] : memref<8x32xf32, #tpu.memory_space<vmem>> -> memref<1x32xf32, #tpu.memory_space<vmem>>
    %69 = tpu.memref_slice %arg9[%c6_i32_37] : memref<8x!tpu.dma_semaphore, #tpu.memory_space<semaphore_mem>> -> memref<1x!tpu.dma_semaphore, #tpu.memory_space<semaphore_mem>>
    %70 = tpu.memref_squeeze %69 : memref<1x!tpu.dma_semaphore, #tpu.memory_space<semaphore_mem>> -> memref<!tpu.dma_semaphore, #tpu.memory_space<semaphore_mem>>
    tpu.enqueue_dma source(%67 : memref<1x32xf32, #tpu.memory_space<any>>) target(%68 : memref<1x32xf32, #tpu.memory_space<vmem>>) target_semaphore(%70 : memref<!tpu.dma_semaphore, #tpu.memory_space<semaphore_mem>>)
    %c7_i32 = arith.constant 7 : i32
    %71 = arith.addi %0, %c7_i32 : i32
    %72 = arith.index_cast %arg1 : i32 to index
    %73 = arith.index_cast %71 : i32 to index
    %74 = memref.load %arg2[%72, %73] : memref<2x8xi32, #tpu.memory_space<smem>>
    %c0_i32_41 = arith.constant 0 : i32
    %c63_i32_42 = arith.constant 63 : i32
    %75 = arith.maxsi %c0_i32_41, %74 : i32
    %76 = arith.minsi %c63_i32_42, %75 : i32
    %c7_i32_43 = arith.constant 7 : i32
    %c0_i32_44 = arith.constant 0 : i32
    %77 = tpu.memref_slice %arg4[%76, %c0_i32_44] : memref<64x32xf32, #tpu.memory_space<any>> -> memref<1x32xf32, #tpu.memory_space<any>>
    %c7_i32_45 = arith.constant 7 : i32
    %c0_i32_46 = arith.constant 0 : i32
    %78 = tpu.memref_slice %arg8[%c7_i32_45, %c0_i32_46] : memref<8x32xf32, #tpu.memory_space<vmem>> -> memref<1x32xf32, #tpu.memory_space<vmem>>
    %79 = tpu.memref_slice %arg9[%c7_i32_43] : memref<8x!tpu.dma_semaphore, #tpu.memory_space<semaphore_mem>> -> memref<1x!tpu.dma_semaphore, #tpu.memory_space<semaphore_mem>>
    %80 = tpu.memref_squeeze %79 : memref<1x!tpu.dma_semaphore, #tpu.memory_space<semaphore_mem>> -> memref<!tpu.dma_semaphore, #tpu.memory_space<semaphore_mem>>
    tpu.enqueue_dma source(%77 : memref<1x32xf32, #tpu.memory_space<any>>) target(%78 : memref<1x32xf32, #tpu.memory_space<vmem>>) target_semaphore(%80 : memref<!tpu.dma_semaphore, #tpu.memory_space<semaphore_mem>>)
    %c0 = arith.constant 0 : index
    %c0_47 = arith.constant 0 : index
    %81 = vector.load %arg3[%c0, %c0_47] : memref<8x1xi32, #tpu.memory_space<vmem>>, vector<8x1xi32>
    %c0_48 = arith.constant 0 : index
    %c0_49 = arith.constant 0 : index
    %82 = vector.load %arg6[%c0_48, %c0_49] : memref<8x32xf32, #tpu.memory_space<vmem>>, vector<8x32xf32>
    %c0_50 = arith.constant 0 : index
    %c0_51 = arith.constant 0 : index
    %83 = vector.load %arg5[%c0_50, %c0_51] : memref<3x32xf32, #tpu.memory_space<vmem>>, vector<1x32xf32>
    %c0_i32_52 = arith.constant 0 : i32
    %84 = vector.broadcast %c0_i32_52 : i32 to vector<8x1xi32>
    %85 = arith.cmpi eq, %81, %84 : vector<8x1xi32>
    %cst = arith.constant 0.000000e+00 : f32
    %86 = vector.shape_cast %85 : vector<8x1xi1> to vector<8x1xi1>
    %87 = vector.broadcast %86 : vector<8x1xi1> to vector<8x32xi1>
    %88 = vector.shape_cast %83 : vector<1x32xf32> to vector<1x32xf32>
    %89 = vector.broadcast %88 : vector<1x32xf32> to vector<8x32xf32>
    %90 = vector.broadcast %cst : f32 to vector<8x32xf32>
    %91 = arith.select %87, %89, %90 : vector<8x32xi1>, vector<8x32xf32>
    %92 = arith.addf %82, %91 : vector<8x32xf32>
    %c1 = arith.constant 1 : index
    %c0_53 = arith.constant 0 : index
    %93 = vector.load %arg5[%c1, %c0_53] : memref<3x32xf32, #tpu.memory_space<vmem>>, vector<1x32xf32>
    %c1_i32_54 = arith.constant 1 : i32
    %94 = vector.broadcast %c1_i32_54 : i32 to vector<8x1xi32>
    %95 = arith.cmpi eq, %81, %94 : vector<8x1xi32>
    %cst_55 = arith.constant 0.000000e+00 : f32
    %96 = vector.shape_cast %95 : vector<8x1xi1> to vector<8x1xi1>
    %97 = vector.broadcast %96 : vector<8x1xi1> to vector<8x32xi1>
    %98 = vector.shape_cast %93 : vector<1x32xf32> to vector<1x32xf32>
    %99 = vector.broadcast %98 : vector<1x32xf32> to vector<8x32xf32>
    %100 = vector.broadcast %cst_55 : f32 to vector<8x32xf32>
    %101 = arith.select %97, %99, %100 : vector<8x32xi1>, vector<8x32xf32>
    %102 = arith.addf %92, %101 : vector<8x32xf32>
    %c2 = arith.constant 2 : index
    %c0_56 = arith.constant 0 : index
    %103 = vector.load %arg5[%c2, %c0_56] : memref<3x32xf32, #tpu.memory_space<vmem>>, vector<1x32xf32>
    %c2_i32_57 = arith.constant 2 : i32
    %104 = vector.broadcast %c2_i32_57 : i32 to vector<8x1xi32>
    %105 = arith.cmpi eq, %81, %104 : vector<8x1xi32>
    %cst_58 = arith.constant 0.000000e+00 : f32
    %106 = vector.shape_cast %105 : vector<8x1xi1> to vector<8x1xi1>
    %107 = vector.broadcast %106 : vector<8x1xi1> to vector<8x32xi1>
    %108 = vector.shape_cast %103 : vector<1x32xf32> to vector<1x32xf32>
    %109 = vector.broadcast %108 : vector<1x32xf32> to vector<8x32xf32>
    %110 = vector.broadcast %cst_58 : f32 to vector<8x32xf32>
    %111 = arith.select %107, %109, %110 : vector<8x32xi1>, vector<8x32xf32>
    %112 = arith.addf %102, %111 : vector<8x32xf32>
    %c0_i32_59 = arith.constant 0 : i32
    %c0_i32_60 = arith.constant 0 : i32
    %c0_i32_61 = arith.constant 0 : i32
    %113 = tpu.memref_slice %arg4[%c0_i32_60, %c0_i32_61] : memref<64x32xf32, #tpu.memory_space<any>> -> memref<1x32xf32, #tpu.memory_space<any>>
    %c0_i32_62 = arith.constant 0 : i32
    %c0_i32_63 = arith.constant 0 : i32
    %114 = tpu.memref_slice %arg8[%c0_i32_62, %c0_i32_63] : memref<8x32xf32, #tpu.memory_space<vmem>> -> memref<1x32xf32, #tpu.memory_space<vmem>>
    %115 = tpu.memref_slice %arg9[%c0_i32_59] : memref<8x!tpu.dma_semaphore, #tpu.memory_space<semaphore_mem>> -> memref<1x!tpu.dma_semaphore, #tpu.memory_space<semaphore_mem>>
    %116 = tpu.memref_squeeze %115 : memref<1x!tpu.dma_semaphore, #tpu.memory_space<semaphore_mem>> -> memref<!tpu.dma_semaphore, #tpu.memory_space<semaphore_mem>>
    tpu.wait_dma2 semaphore(%116 : memref<!tpu.dma_semaphore, #tpu.memory_space<semaphore_mem>>) src(%113 : memref<1x32xf32, #tpu.memory_space<any>>) dst(%114 : memref<1x32xf32, #tpu.memory_space<vmem>>)
    %c1_i32_64 = arith.constant 1 : i32
    %c0_i32_65 = arith.constant 0 : i32
    %c0_i32_66 = arith.constant 0 : i32
    %117 = tpu.memref_slice %arg4[%c0_i32_65, %c0_i32_66] : memref<64x32xf32, #tpu.memory_space<any>> -> memref<1x32xf32, #tpu.memory_space<any>>
    %c1_i32_67 = arith.constant 1 : i32
    %c0_i32_68 = arith.constant 0 : i32
    %118 = tpu.memref_slice %arg8[%c1_i32_67, %c0_i32_68] : memref<8x32xf32, #tpu.memory_space<vmem>> -> memref<1x32xf32, #tpu.memory_space<vmem>>
    %119 = tpu.memref_slice %arg9[%c1_i32_64] : memref<8x!tpu.dma_semaphore, #tpu.memory_space<semaphore_mem>> -> memref<1x!tpu.dma_semaphore, #tpu.memory_space<semaphore_mem>>
    %120 = tpu.memref_squeeze %119 : memref<1x!tpu.dma_semaphore, #tpu.memory_space<semaphore_mem>> -> memref<!tpu.dma_semaphore, #tpu.memory_space<semaphore_mem>>
    tpu.wait_dma2 semaphore(%120 : memref<!tpu.dma_semaphore, #tpu.memory_space<semaphore_mem>>) src(%117 : memref<1x32xf32, #tpu.memory_space<any>>) dst(%118 : memref<1x32xf32, #tpu.memory_space<vmem>>)
    %c2_i32_69 = arith.constant 2 : i32
    %c0_i32_70 = arith.constant 0 : i32
    %c0_i32_71 = arith.constant 0 : i32
    %121 = tpu.memref_slice %arg4[%c0_i32_70, %c0_i32_71] : memref<64x32xf32, #tpu.memory_space<any>> -> memref<1x32xf32, #tpu.memory_space<any>>
    %c2_i32_72 = arith.constant 2 : i32
    %c0_i32_73 = arith.constant 0 : i32
    %122 = tpu.memref_slice %arg8[%c2_i32_72, %c0_i32_73] : memref<8x32xf32, #tpu.memory_space<vmem>> -> memref<1x32xf32, #tpu.memory_space<vmem>>
    %123 = tpu.memref_slice %arg9[%c2_i32_69] : memref<8x!tpu.dma_semaphore, #tpu.memory_space<semaphore_mem>> -> memref<1x!tpu.dma_semaphore, #tpu.memory_space<semaphore_mem>>
    %124 = tpu.memref_squeeze %123 : memref<1x!tpu.dma_semaphore, #tpu.memory_space<semaphore_mem>> -> memref<!tpu.dma_semaphore, #tpu.memory_space<semaphore_mem>>
    tpu.wait_dma2 semaphore(%124 : memref<!tpu.dma_semaphore, #tpu.memory_space<semaphore_mem>>) src(%121 : memref<1x32xf32, #tpu.memory_space<any>>) dst(%122 : memref<1x32xf32, #tpu.memory_space<vmem>>)
    %c3_i32_74 = arith.constant 3 : i32
    %c0_i32_75 = arith.constant 0 : i32
    %c0_i32_76 = arith.constant 0 : i32
    %125 = tpu.memref_slice %arg4[%c0_i32_75, %c0_i32_76] : memref<64x32xf32, #tpu.memory_space<any>> -> memref<1x32xf32, #tpu.memory_space<any>>
    %c3_i32_77 = arith.constant 3 : i32
    %c0_i32_78 = arith.constant 0 : i32
    %126 = tpu.memref_slice %arg8[%c3_i32_77, %c0_i32_78] : memref<8x32xf32, #tpu.memory_space<vmem>> -> memref<1x32xf32, #tpu.memory_space<vmem>>
    %127 = tpu.memref_slice %arg9[%c3_i32_74] : memref<8x!tpu.dma_semaphore, #tpu.memory_space<semaphore_mem>> -> memref<1x!tpu.dma_semaphore, #tpu.memory_space<semaphore_mem>>
    %128 = tpu.memref_squeeze %127 : memref<1x!tpu.dma_semaphore, #tpu.memory_space<semaphore_mem>> -> memref<!tpu.dma_semaphore, #tpu.memory_space<semaphore_mem>>
    tpu.wait_dma2 semaphore(%128 : memref<!tpu.dma_semaphore, #tpu.memory_space<semaphore_mem>>) src(%125 : memref<1x32xf32, #tpu.memory_space<any>>) dst(%126 : memref<1x32xf32, #tpu.memory_space<vmem>>)
    %c4_i32_79 = arith.constant 4 : i32
    %c0_i32_80 = arith.constant 0 : i32
    %c0_i32_81 = arith.constant 0 : i32
    %129 = tpu.memref_slice %arg4[%c0_i32_80, %c0_i32_81] : memref<64x32xf32, #tpu.memory_space<any>> -> memref<1x32xf32, #tpu.memory_space<any>>
    %c4_i32_82 = arith.constant 4 : i32
    %c0_i32_83 = arith.constant 0 : i32
    %130 = tpu.memref_slice %arg8[%c4_i32_82, %c0_i32_83] : memref<8x32xf32, #tpu.memory_space<vmem>> -> memref<1x32xf32, #tpu.memory_space<vmem>>
    %131 = tpu.memref_slice %arg9[%c4_i32_79] : memref<8x!tpu.dma_semaphore, #tpu.memory_space<semaphore_mem>> -> memref<1x!tpu.dma_semaphore, #tpu.memory_space<semaphore_mem>>
    %132 = tpu.memref_squeeze %131 : memref<1x!tpu.dma_semaphore, #tpu.memory_space<semaphore_mem>> -> memref<!tpu.dma_semaphore, #tpu.memory_space<semaphore_mem>>
    tpu.wait_dma2 semaphore(%132 : memref<!tpu.dma_semaphore, #tpu.memory_space<semaphore_mem>>) src(%129 : memref<1x32xf32, #tpu.memory_space<any>>) dst(%130 : memref<1x32xf32, #tpu.memory_space<vmem>>)
    %c5_i32_84 = arith.constant 5 : i32
    %c0_i32_85 = arith.constant 0 : i32
    %c0_i32_86 = arith.constant 0 : i32
    %133 = tpu.memref_slice %arg4[%c0_i32_85, %c0_i32_86] : memref<64x32xf32, #tpu.memory_space<any>> -> memref<1x32xf32, #tpu.memory_space<any>>
    %c5_i32_87 = arith.constant 5 : i32
    %c0_i32_88 = arith.constant 0 : i32
    %134 = tpu.memref_slice %arg8[%c5_i32_87, %c0_i32_88] : memref<8x32xf32, #tpu.memory_space<vmem>> -> memref<1x32xf32, #tpu.memory_space<vmem>>
    %135 = tpu.memref_slice %arg9[%c5_i32_84] : memref<8x!tpu.dma_semaphore, #tpu.memory_space<semaphore_mem>> -> memref<1x!tpu.dma_semaphore, #tpu.memory_space<semaphore_mem>>
    %136 = tpu.memref_squeeze %135 : memref<1x!tpu.dma_semaphore, #tpu.memory_space<semaphore_mem>> -> memref<!tpu.dma_semaphore, #tpu.memory_space<semaphore_mem>>
    tpu.wait_dma2 semaphore(%136 : memref<!tpu.dma_semaphore, #tpu.memory_space<semaphore_mem>>) src(%133 : memref<1x32xf32, #tpu.memory_space<any>>) dst(%134 : memref<1x32xf32, #tpu.memory_space<vmem>>)
    %c6_i32_89 = arith.constant 6 : i32
    %c0_i32_90 = arith.constant 0 : i32
    %c0_i32_91 = arith.constant 0 : i32
    %137 = tpu.memref_slice %arg4[%c0_i32_90, %c0_i32_91] : memref<64x32xf32, #tpu.memory_space<any>> -> memref<1x32xf32, #tpu.memory_space<any>>
    %c6_i32_92 = arith.constant 6 : i32
    %c0_i32_93 = arith.constant 0 : i32
    %138 = tpu.memref_slice %arg8[%c6_i32_92, %c0_i32_93] : memref<8x32xf32, #tpu.memory_space<vmem>> -> memref<1x32xf32, #tpu.memory_space<vmem>>
    %139 = tpu.memref_slice %arg9[%c6_i32_89] : memref<8x!tpu.dma_semaphore, #tpu.memory_space<semaphore_mem>> -> memref<1x!tpu.dma_semaphore, #tpu.memory_space<semaphore_mem>>
    %140 = tpu.memref_squeeze %139 : memref<1x!tpu.dma_semaphore, #tpu.memory_space<semaphore_mem>> -> memref<!tpu.dma_semaphore, #tpu.memory_space<semaphore_mem>>
    tpu.wait_dma2 semaphore(%140 : memref<!tpu.dma_semaphore, #tpu.memory_space<semaphore_mem>>) src(%137 : memref<1x32xf32, #tpu.memory_space<any>>) dst(%138 : memref<1x32xf32, #tpu.memory_space<vmem>>)
    %c7_i32_94 = arith.constant 7 : i32
    %c0_i32_95 = arith.constant 0 : i32
    %c0_i32_96 = arith.constant 0 : i32
    %141 = tpu.memref_slice %arg4[%c0_i32_95, %c0_i32_96] : memref<64x32xf32, #tpu.memory_space<any>> -> memref<1x32xf32, #tpu.memory_space<any>>
    %c7_i32_97 = arith.constant 7 : i32
    %c0_i32_98 = arith.constant 0 : i32
    %142 = tpu.memref_slice %arg8[%c7_i32_97, %c0_i32_98] : memref<8x32xf32, #tpu.memory_space<vmem>> -> memref<1x32xf32, #tpu.memory_space<vmem>>
    %143 = tpu.memref_slice %arg9[%c7_i32_94] : memref<8x!tpu.dma_semaphore, #tpu.memory_space<semaphore_mem>> -> memref<1x!tpu.dma_semaphore, #tpu.memory_space<semaphore_mem>>
    %144 = tpu.memref_squeeze %143 : memref<1x!tpu.dma_semaphore, #tpu.memory_space<semaphore_mem>> -> memref<!tpu.dma_semaphore, #tpu.memory_space<semaphore_mem>>
    tpu.wait_dma2 semaphore(%144 : memref<!tpu.dma_semaphore, #tpu.memory_space<semaphore_mem>>) src(%141 : memref<1x32xf32, #tpu.memory_space<any>>) dst(%142 : memref<1x32xf32, #tpu.memory_space<vmem>>)
    %c0_99 = arith.constant 0 : index
    %c0_100 = arith.constant 0 : index
    %145 = vector.load %arg8[%c0_99, %c0_100] : memref<8x32xf32, #tpu.memory_space<vmem>>, vector<8x32xf32>
    %146 = arith.addf %145, %112 : vector<8x32xf32>
    %c0_101 = arith.constant 0 : index
    %c0_102 = arith.constant 0 : index
    %147 = vector.load %arg7[%c0_101, %c0_102] : memref<8x32xf32, #tpu.memory_space<vmem>>, vector<8x32xf32>
    tpu.vector_store %arg7[%c0_101, %c0_102], %146 {strides = array<i32>} : memref<8x32xf32, #tpu.memory_space<vmem>>, vector<8x32xf32>,
    return
  }
  func.func @transform_0(%arg0: i32, %arg1: i32, %arg2: memref<2x8xi32, #tpu.memory_space<smem>>) -> (i32, i32) {
    %c1_i32 = arith.constant 1 : i32
    %0 = arith.muli %arg1, %c1_i32 : i32
    %1 = arith.addi %0, %arg0 : i32
    %c0_i32 = arith.constant 0 : i32
    %c0_i32_0 = arith.constant 0 : i32
    return %1, %c0_i32 : i32, i32
  }
  func.func @transform_2(%arg0: i32, %arg1: i32, %arg2: memref<2x8xi32, #tpu.memory_space<smem>>) -> (i32, i32) {
    %c0_i32 = arith.constant 0 : i32
    %c0_i32_0 = arith.constant 0 : i32
    %c0_i32_1 = arith.constant 0 : i32
    return %c0_i32, %c0_i32_0 : i32, i32
  }
  func.func @transform_3(%arg0: i32, %arg1: i32, %arg2: memref<2x8xi32, #tpu.memory_space<smem>>) -> (i32, i32) {
    %c0_i32 = arith.constant 0 : i32
    %c0_i32_0 = arith.constant 0 : i32
    return %arg0, %c0_i32 : i32, i32
  }
  func.func @transform_4(%arg0: i32, %arg1: i32, %arg2: memref<2x8xi32, #tpu.memory_space<smem>>) -> (i32, i32) {
    %c1_i32 = arith.constant 1 : i32
    %0 = arith.muli %arg1, %c1_i32 : i32
    %1 = arith.addi %0, %arg0 : i32
    %c0_i32 = arith.constant 0 : i32
    %c0_i32_0 = arith.constant 0 : i32
    return %1, %c0_i32 : i32, i32
  }
}

</mosaic_0001>

<llo_original>
// kernel: tpu_custom_call.1
$region0: #{tpu_custom_call.1}
  #allocation0 [shape = 'u32[]', space=smem, size = 0x4, offset = 0x4, fixed_abs, tag = 'smem constant byte address 0x4 - core index']
  #allocation1 [shape = 'u32[72,128]{1,0:T(1,128)}', space=vmem, size = 0x9000, scoped, tag = 'internal scratch']
  #allocation2 [shape = 'f32[8,32]{1,0:T(8,128)}', space=vmem, size = 0x1000, scoped, tag = 'scratch operand']
  #allocation3 [shape = 's32[8]{0}', space=sflag, size = 0x20, scoped, tag = 'scratch operand']
  #allocation4 [shape = 's32[1]{0}', space=sflag, size = 0x4, scoped, tag = 'scoped memory for tpu_custom_call.1']
  #allocation5 [shape = 'u8[1024]{0}', space=smem, size = 0x400, scoped, tag = 'prefetched SMEM operand 0']
  #allocation8 [shape = 's32[]', space=sflag, size = 0x4, offset = 0, fixed_abs, tag = 'sflag constant byte address 0x0 - dummy sync flag']
  #allocation9 [shape = 's32[]', space=sflag, size = 0x4, offset = 0, fixed_abs, tag = 'sflag constant byte address 0x0 - dummy sync flag']
  #allocation10 [shape = 's32[]', space=sflag, size = 0x4, offset = 0, fixed_abs, tag = 'sflag constant byte address 0x0 - dummy sync flag']
  #allocation11 [shape = 's32[]', space=sflag, size = 0x4, offset = 0, fixed_abs, tag = 'sflag constant byte address 0x0 - dummy sync flag']
  #allocation12 [shape = 's32[]', space=sflag, size = 0x4, offset = 0, fixed_abs, tag = 'sflag constant byte address 0x0 - dummy sync flag']
  #allocation13 [shape = 's32[]', space=sflag, size = 0x4, offset = 0, fixed_abs, tag = 'sflag constant byte address 0x0 - dummy sync flag']
  #allocation14 [shape = 's32[]', space=sflag, size = 0x4, offset = 0, fixed_abs, tag = 'sflag constant byte address 0x0 - dummy sync flag']
  #allocation15 [shape = 's32[]', space=sflag, size = 0x4, offset = 0, fixed_abs, tag = 'sflag constant byte address 0x0 - dummy sync flag']
  %s0 = inlined_call_operand.vmem [shape: s32[2,8], index: 0, kind: input, shape index: {}]
  %s1 = inlined_call_operand.vmem [shape: s32[16,1], index: 1, kind: input, shape index: {}]
  %s2 = inlined_call_operand.vmem [shape: f32[64,32], index: 2, kind: input, shape index: {}]
  %s3 = inlined_call_operand.vmem [shape: f32[3,32], index: 3, kind: input, shape index: {}]
  %s4 = inlined_call_operand.vmem [shape: f32[32,32], index: 4, kind: input, shape index: {}]
  %s5 = inlined_call_operand.hbm [shape: f32[16,32], index: 5, kind: output, shape index: {}]
  %s6 = sld [smem:[#allocation0]]
  $region285: #{tpu_custom_call.1} parent=0
    _
  %s8 = ssub.s32 1, %s6
  %s9 = scalar_select 0, %s8, %s6
  %s11 = sshll.u32 %s0, 4
  %s12 = int_to_ptr.vmem [resolvable:$true] %s11
  %14 = dma.vmem_to_smem %s12, 32, [#allocation5], [#allocation4]
  %16 = dma.done [#allocation4], 32
  %17 = sfence
  $region1: #{tpu_custom_call.1} parent=0
    #allocation6 [shape = 'u8[8192]{0}', space=vmem, size = 0x2000, scoped, tag = 'output window, operand 0']
    #allocation7 [shape = 's32[2]{0}', space=sflag, size = 0x8, scoped, tag = 'scoped memory for tpu_custom_call.1']
    %18 = vsyncpa [#allocation7], 0
    %s19 = scalar_lea.sflag [#allocation7], 1
    %20 = vsyncpa %s19, 0
    loop: start=0, step=1, limit=4
    $region2: #{tpu_custom_call.1} parent=1 // loop_pre_header
      _
    $region3: #{tpu_custom_call.1} parent=1 // loop_header
      %s22 = sphi 0, %s26
      %p23 = scmp.ge.s32.totalorder %s22, 4
      %s29 = sphi 0, %s41
      %s30 = sphi 0, %s37
      %s31 = sphi 0, %s29
      %s32 = sphi 0, %s30
      %s33 = sphi 0, %s31
      %s34 = sphi 0, %s32
      %s46 = sphi 0, %s48
      %s49 = sphi 0, %s46
      %s50 = sphi 0, %s49
      %s66 = sphi 0, %s50
      %s70 = sphi 0, %s70
      %s72 = sphi 0, %s70
      %s73 = sphi 0, %s72
      %s87 = sphi 0, %s73
      %s93 = sphi 0, %s95
      %s96 = sphi 0, %s93
      %s97 = sphi 0, %s96
      %s113 = sphi 0, %s97
      %s121 = sphi 0, %s123
      %s124 = sphi 0, %s121
      %s125 = sphi 0, %s124
      %s141 = sphi 0, %s125
    $region4: #{tpu_custom_call.1} parent=1 // loop_header_branch
      %25 = sbr.rel (%p23) target = $region8
    $region5: #{tpu_custom_call.1} parent=1 // loop_body
      %s27 = ssub.s32 %s22, 1
      %s28 = ssub.s32 %s22, 2
      %s35 = sadd.s32 1, %s30
      %p36 = scmp.ge.s32.totalorder %s35, 2
      %s37 = scalar_select %p36, 0, %s35
      %s38 = sadd.s32 1, %s29
      %s39 = scalar_select %p36, %s38, %s29
      %p40 = scmp.ge.s32.totalorder %s39, 1
      %s41 = scalar_select %p40, 0, %s39
      %s42 = sadd.s32 %s30, %s29
      %s43 = sadd.s32 %s37, %s41
      %s44 = ssub.s32 %s42, %s43
      %p45 = scmp.eq.s32.totalorder %s44, 0
      %s47 = sadd.s32 %s46, 1
      %s48 = scalar_select %p45, %s46, %s47
      %p51 = pneg %p45
      %p52 = scmp.eq.s32.totalorder %s22, 1
      %p53 = por %p51, %p52
      %p54 = scmp.ne.s32.totalorder %s46, %s49
      %p55 = scmp.eq.s32.totalorder %s22, 0
      %p56 = por %p54, %p55
      %p57 = scmp.ne.s32.totalorder %s46, %s49
      %p58 = scmp.eq.s32.totalorder %s27, 1
      %p59 = por %p57, %p58
      %p60 = scmp.ne.s32.totalorder %s49, %s50
      %p61 = scmp.eq.s32.totalorder %s27, 0
      %p62 = por %p60, %p61
      %p63 = scmp.ne.s32.totalorder %s49, %s50
      %p64 = scmp.eq.s32.totalorder %s28, 1
      %p65 = por %p63, %p64
      %p67 = scmp.ne.s32.totalorder %s50, %s66
      %p68 = scmp.eq.s32.totalorder %s28, 0
      %p69 = por %p67, %p68
      %s71 = sadd.s32 %s70, 1
      %p74 = scmp.eq.s32.totalorder %s22, 1
      %p75 = scmp.ne.s32.totalorder %s70, %s72
      %p76 = scmp.eq.s32.totalorder %s22, 0
      %p77 = por %p75, %p76
      %p78 = scmp.ne.s32.totalorder %s70, %s72
      %p79 = scmp.eq.s32.totalorder %s27, 1
      %p80 = por %p78, %p79
      %p81 = scmp.ne.s32.totalorder %s72, %s73
      %p82 = scmp.eq.s32.totalorder %s27, 0
      %p83 = por %p81, %p82
      %p84 = scmp.ne.s32.totalorder %s72, %s73
      %p85 = scmp.eq.s32.totalorder %s28, 1
      %p86 = por %p84, %p85
      %p88 = scmp.ne.s32.totalorder %s73, %s87
      %p89 = scmp.eq.s32.totalorder %s28, 0
      %p90 = por %p88, %p89
      %s91 = ssub.s32 %s29, %s41
      %p92 = scmp.eq.s32.totalorder %s91, 0
      %s94 = sadd.s32 %s93, 1
      %s95 = scalar_select %p92, %s93, %s94
      %p98 = pneg %p92
      %p99 = scmp.eq.s32.totalorder %s22, 1
      %p100 = por %p98, %p99
      %p101 = scmp.ne.s32.totalorder %s93, %s96
      %p102 = scmp.eq.s32.totalorder %s22, 0
      %p103 = por %p101, %p102
      %p104 = scmp.ne.s32.totalorder %s93, %s96
      %p105 = scmp.eq.s32.totalorder %s27, 1
      %p106 = por %p104, %p105
      %p107 = scmp.ne.s32.totalorder %s96, %s97
      %p108 = scmp.eq.s32.totalorder %s27, 0
      %p109 = por %p107, %p108
      %p110 = scmp.ne.s32.totalorder %s96, %s97
      %p111 = scmp.eq.s32.totalorder %s28, 1
      %p112 = por %p110, %p111
      %p114 = scmp.ne.s32.totalorder %s97, %s113
      %p115 = scmp.eq.s32.totalorder %s28, 0
      %p116 = por %p114, %p115
      %s117 = sadd.s32 %s30, %s29
      %s118 = sadd.s32 %s37, %s41
      %s119 = ssub.s32 %s117, %s118
      %p120 = scmp.eq.s32.totalorder %s119, 0
      %s122 = sadd.s32 %s121, 1
      %s123 = scalar_select %p120, %s121, %s122
      %p126 = pneg %p120
      %p127 = scmp.eq.s32.totalorder %s22, 1
      %p128 = por %p126, %p127
      %p129 = scmp.ne.s32.totalorder %s121, %s124
      %p130 = scmp.eq.s32.totalorder %s22, 0
      %p131 = por %p129, %p130
      %p132 = scmp.ne.s32.totalorder %s121, %s124
      %p133 = scmp.eq.s32.totalorder %s27, 1
      %p134 = por %p132, %p133
      %p135 = scmp.ne.s32.totalorder %s124, %s125
      %p136 = scmp.eq.s32.totalorder %s27, 0
      %p137 = por %p135, %p136
      %p138 = scmp.ne.s32.totalorder %s124, %s125
      %p139 = scmp.eq.s32.totalorder %s28, 1
      %p140 = por %p138, %p139
      %p142 = scmp.ne.s32.totalorder %s125, %s141
      %p143 = scmp.eq.s32.totalorder %s28, 0
      %p144 = por %p142, %p143
      %p145 = scmp.le.s32.totalorder 1, %s22
      %p146 = scmp.lt.s32.totalorder %s22, 3
      %p147 = pnand %p145, %p146
      %p148 = pneg %p147
      // Predicated region
      $region9: #{tpu_custom_call.1} parent=5 // pred_check
        _
      $region10: #{tpu_custom_call.1} parent=5 // pred_check_branch
        %150 = sbr.rel (%p147) target = $region12
      $region11: #{tpu_custom_call.1} parent=5 // pred_region
        %s151 = ssub.s32 %s22, 1
        // Predicated region
        $region13: #{tpu_custom_call.1} parent=11 // pred_check
          %p152 = pneg %p83
        $region14: #{tpu_custom_call.1} parent=11 // pred_check_branch
          %154 = sbr.rel (%p152) target = $region16
        $region15: #{tpu_custom_call.1} parent=11 // pred_region
          _
        $region16: #{tpu_custom_call.1} parent=11 // pred_fallthru
          _
        // Predicated region
        $region17: #{tpu_custom_call.1} parent=11 // pred_check
          %p155 = pneg %p109
        $region18: #{tpu_custom_call.1} parent=11 // pred_check_branch
          %157 = sbr.rel (%p155) target = $region20
        $region19: #{tpu_custom_call.1} parent=11 // pred_region
          %p158 = scmp.lt.s32.totalorder %s31, 3
          %s159 = scalar_select %p158, %s31, 3
          %s160 = smul.addr %s159, 8
          %s161 = scalar_lea.vmem %s4, %s160
        $region20: #{tpu_custom_call.1} parent=11 // pred_fallthru
          _
      $region12: #{tpu_custom_call.1} parent=5 // pred_fallthru
        _
      %p162 = scmp.lt.s32.totalorder %s22, 2
      // Predicated region
      $region21: #{tpu_custom_call.1} parent=5 // pred_check
        %p163 = pneg %p162
      $region22: #{tpu_custom_call.1} parent=5 // pred_check_branch
        %165 = sbr.rel (%p163) target = $region24
      $region23: #{tpu_custom_call.1} parent=5 // pred_region
        // Predicated region
        $region25: #{tpu_custom_call.1} parent=23 // pred_check
          %p166 = pneg %p56
        $region26: #{tpu_custom_call.1} parent=23 // pred_check_branch
          %168 = sbr.rel (%p166) target = $region28
        $region27: #{tpu_custom_call.1} parent=23 // pred_region
          %s169 = sadd.s32 %s30, %s29
          %p170 = scmp.lt.s32.totalorder %s169, 1
          %s171 = scalar_select %p170, %s169, 1
          %s172 = smul.addr %s171, 8
          %s173 = scalar_lea.vmem %s1, %s172
          %s174 = sadd.s32 %s30, %s29
        $region28: #{tpu_custom_call.1} parent=23 // pred_fallthru
          _
      $region24: #{tpu_custom_call.1} parent=5 // pred_fallthru
        _
      %p175 = scmp.le.s32.totalorder 1, %s22
      %p176 = scmp.lt.s32.totalorder %s22, 3
      %p177 = pnand %p175, %p176
      %p178 = pneg %p177
      // Predicated region
      $region29: #{tpu_custom_call.1} parent=5 // pred_check
        _
      $region30: #{tpu_custom_call.1} parent=5 // pred_check_branch
        %180 = sbr.rel (%p177) target = $region32
      $region31: #{tpu_custom_call.1} parent=5 // pred_region
        %s181 = ssub.s32 %s22, 1
        %s182 = sadd.s32 %s32, %s31
        %p183 = scmp.lt.s32.totalorder %s182, 1
        %s184 = scalar_select %p183, %s182, 1
        %s185 = smul.addr %s184, 8
        %s186 = scalar_lea.vmem %s1, %s185
        %p187 = pneg %p62
        %p188 = pneg %p59
        %p189 = pneg %p83
        %p190 = pneg %p80
        %p191 = scmp.lt.s32.totalorder %s31, 3
        %s192 = scalar_select %p191, %s31, 3
        %s193 = smul.addr %s192, 8
        %s194 = scalar_lea.vmem %s4, %s193
        %p195 = pneg %p109
        %p196 = pneg %p106
        %p197 = pneg %p137
        %p198 = pneg %p134
        %s199 = sand.u32 %s124, 1
        %s200 = scalar_lea.sflag [#allocation7], %s199
        %s201 = sand.u32 %s124, 1
        %s202 = smul.addr %s201, 8
        %s203 = scalar_lea.vmem [#allocation6], %s202
        %s204 = sadd.s32 %s32, %s31
        %p205 = scmp.lt.s32.totalorder %s204, 1
        %s206 = scalar_select %p205, %s204, 1
        %s207 = smul.addr %s206, 8
        %s208 = scalar_lea.vmem %s1, %s207
        %s209 = sadd.s32 %s32, %s31
        %p210 = scmp.lt.s32.totalorder %s31, 3
        %s211 = scalar_select %p210, %s31, 3
        %s212 = smul.addr %s211, 8
        %s213 = scalar_lea.vmem %s4, %s212
        %s214 = sadd.s32 %s32, %s31
        %s215 = smul.u32 %s31, 8
        %s216 = sshra.s32 %s215, 7
        %s217 = sand.u32 %s215, 127
        %s218 = sadd.s32 %s216, %s32
        %s219 = smul.u32 %s218, 128
        %s220 = sshra.s32 %s215, 7
        %s221 = sand.u32 %s215, 127
        %s222 = sadd.s32 %s219, %s221
        %s223 = sld [smem:[#allocation5 + %s222]]
        %p224 = scmp.gt.s32.totalorder %s223, 0
        %s225 = scalar_select %p224, %s223, 0
        %p226 = scmp.lt.s32.totalorder %s225, 63
        %s227 = scalar_select %p226, %s225, 63
        %s228 = scalar_lea.vmem %s2, %s227
        // Predicated region
        $region33: #{tpu_custom_call.1} parent=31 // pred_check
          _
        $region34: #{tpu_custom_call.1} parent=31 // pred_check_branch
          %230 = sbr.rel target = $region36
        $region35: #{tpu_custom_call.1} parent=31 // pred_region
          // Predicated region
          $region48: #{tpu_custom_call.1} parent=35 // pred_check
            _
          $region49: #{tpu_custom_call.1} parent=35 // pred_check_branch
            %246 = sbr.rel (0) target = $region51
          $region50: #{tpu_custom_call.1} parent=35 // pred_region
            %s248 = ssub.s32 2, 1
            loop: start=0, step=1, limit=1
            $region52: #{tpu_custom_call.1} parent=50 // loop_pre_header
              _
            $region53: #{tpu_custom_call.1} parent=50 // loop_header
              %s250 = sphi 0, %s254
              %p251 = scmp.ge.s32.totalorder %s250, 1
              %s255 = sphi %s228, %s228
              %s256 = sphi [#allocation2], [#allocation2]
            $region54: #{tpu_custom_call.1} parent=50 // loop_header_branch
              %253 = sbr.rel (%p251) target = $region58
            $region55: #{tpu_custom_call.1} parent=50 // loop_body
              %v257 = vld [vmem:[%s255] sm:%s248]
              %258 = vst [vmem:[%s256] sm:%s248] %v257
            $region56: #{tpu_custom_call.1} parent=50 // loop_footer
              %s254 = sadd.s32 1, %s250
            $region57: #{tpu_custom_call.1} parent=50 // loop_footer_branch
              %249 = sbr.rel target = $region53
            $region58: #{tpu_custom_call.1} parent=50 // loop_exit
              _
          $region51: #{tpu_custom_call.1} parent=35 // pred_fallthru
            _
        $region36: #{tpu_custom_call.1} parent=31 // pred_fallthru
          _
        // Predicated region
        $region37: #{tpu_custom_call.1} parent=31 // pred_check
          _
        $region38: #{tpu_custom_call.1} parent=31 // pred_check_branch
          %232 = sbr.rel (0) target = $region40
        $region39: #{tpu_custom_call.1} parent=31 // pred_region
          %s234 = ssub.s32 2, 1
          loop: start=0, step=1, limit=1
          $region41: #{tpu_custom_call.1} parent=39 // loop_pre_header
            _
          $region42: #{tpu_custom_call.1} parent=39 // loop_header
            %s236 = sphi 0, %s240
            %p237 = scmp.ge.s32.totalorder %s236, 1
            %s241 = sphi %s228, %s228
            %s242 = sphi [#allocation2], [#allocation2]
          $region43: #{tpu_custom_call.1} parent=39 // loop_header_branch
            %239 = sbr.rel (%p237) target = $region47
          $region44: #{tpu_custom_call.1} parent=39 // loop_body
            %v243 = vld [vmem:[%s241] sm:%s234]
            %244 = vst [vmem:[%s242] sm:%s234] %v243
          $region45: #{tpu_custom_call.1} parent=39 // loop_footer
            %s240 = sadd.s32 1, %s236
          $region46: #{tpu_custom_call.1} parent=39 // loop_footer_branch
            %235 = sbr.rel target = $region42
          $region47: #{tpu_custom_call.1} parent=39 // loop_exit
            _
        $region40: #{tpu_custom_call.1} parent=31 // pred_fallthru
          _
        // Predicated region
        $region59: #{tpu_custom_call.1} parent=31 // pred_check
          _
        $region60: #{tpu_custom_call.1} parent=31 // pred_check_branch
          %261 = sbr.rel (0) target = $region62
        $region61: #{tpu_custom_call.1} parent=31 // pred_region
          %262 = vsyncadd [#allocation3], 16
        $region62: #{tpu_custom_call.1} parent=31 // pred_fallthru
          _
        %s263 = sadd.s32 %s215, 1
        %s264 = sshra.s32 %s263, 7
        %s265 = sand.u32 %s263, 127
        %s266 = sadd.s32 %s264, %s32
        %s267 = smul.u32 %s266, 128
        %s268 = sshra.s32 %s263, 7
        %s269 = sand.u32 %s263, 127
        %s270 = sadd.s32 %s267, %s269
        %s271 = sld [smem:[#allocation5 + %s270]]
        %p272 = scmp.gt.s32.totalorder %s271, 0
        %s273 = scalar_select %p272, %s271, 0
        %p274 = scmp.lt.s32.totalorder %s273, 63
        %s275 = scalar_select %p274, %s273, 63
        %s276 = scalar_lea.vmem %s2, %s275
        %s277 = scalar_lea.vmem [#allocation2], 1
        %s278 = scalar_lea.sflag [#allocation3], 1
        // Predicated region
        $region63: #{tpu_custom_call.1} parent=31 // pred_check
          _
        $region64: #{tpu_custom_call.1} parent=31 // pred_check_branch
          %280 = sbr.rel target = $region66
        $region65: #{tpu_custom_call.1} parent=31 // pred_region
          // Predicated region
          $region78: #{tpu_custom_call.1} parent=65 // pred_check
            _
          $region79: #{tpu_custom_call.1} parent=65 // pred_check_branch
            %296 = sbr.rel (0) target = $region81
          $region80: #{tpu_custom_call.1} parent=65 // pred_region
            %s298 = ssub.s32 2, 1
            loop: start=0, step=1, limit=1
            $region82: #{tpu_custom_call.1} parent=80 // loop_pre_header
              _
            $region83: #{tpu_custom_call.1} parent=80 // loop_header
              %s300 = sphi 0, %s304
              %p301 = scmp.ge.s32.totalorder %s300, 1
              %s305 = sphi %s276, %s276
              %s306 = sphi %s277, %s277
            $region84: #{tpu_custom_call.1} parent=80 // loop_header_branch
              %303 = sbr.rel (%p301) target = $region88
            $region85: #{tpu_custom_call.1} parent=80 // loop_body
              %v307 = vld [vmem:[%s305] sm:%s298]
              %308 = vst [vmem:[%s306] sm:%s298] %v307
            $region86: #{tpu_custom_call.1} parent=80 // loop_footer
              %s304 = sadd.s32 1, %s300
            $region87: #{tpu_custom_call.1} parent=80 // loop_footer_branch
              %299 = sbr.rel target = $region83
            $region88: #{tpu_custom_call.1} parent=80 // loop_exit
              _
          $region81: #{tpu_custom_call.1} parent=65 // pred_fallthru
            _
        $region66: #{tpu_custom_call.1} parent=31 // pred_fallthru
          _
        // Predicated region
        $region67: #{tpu_custom_call.1} parent=31 // pred_check
          _
        $region68: #{tpu_custom_call.1} parent=31 // pred_check_branch
          %282 = sbr.rel (0) target = $region70
        $region69: #{tpu_custom_call.1} parent=31 // pred_region
          %s284 = ssub.s32 2, 1
          loop: start=0, step=1, limit=1
          $region71: #{tpu_custom_call.1} parent=69 // loop_pre_header
            _
          $region72: #{tpu_custom_call.1} parent=69 // loop_header
            %s286 = sphi 0, %s290
            %p287 = scmp.ge.s32.totalorder %s286, 1
            %s291 = sphi %s276, %s276
            %s292 = sphi %s277, %s277
          $region73: #{tpu_custom_call.1} parent=69 // loop_header_branch
            %289 = sbr.rel (%p287) target = $region77
          $region74: #{tpu_custom_call.1} parent=69 // loop_body
            %v293 = vld [vmem:[%s291] sm:%s284]
            %294 = vst [vmem:[%s292] sm:%s284] %v293
          $region75: #{tpu_custom_call.1} parent=69 // loop_footer
            %s290 = sadd.s32 1, %s286
          $region76: #{tpu_custom_call.1} parent=69 // loop_footer_branch
            %285 = sbr.rel target = $region72
          $region77: #{tpu_custom_call.1} parent=69 // loop_exit
            _
        $region70: #{tpu_custom_call.1} parent=31 // pred_fallthru
          _
        // Predicated region
        $region89: #{tpu_custom_call.1} parent=31 // pred_check
          _
        $region90: #{tpu_custom_call.1} parent=31 // pred_check_branch
          %311 = sbr.rel (0) target = $region92
        $region91: #{tpu_custom_call.1} parent=31 // pred_region
          %312 = vsyncadd %s278, 16
        $region92: #{tpu_custom_call.1} parent=31 // pred_fallthru
          _
        %s313 = sadd.s32 %s215, 2
        %s314 = sshra.s32 %s313, 7
        %s315 = sand.u32 %s313, 127
        %s316 = sadd.s32 %s314, %s32
        %s317 = smul.u32 %s316, 128
        %s318 = sshra.s32 %s313, 7
        %s319 = sand.u32 %s313, 127
        %s320 = sadd.s32 %s317, %s319
        %s321 = sld [smem:[#allocation5 + %s320]]
        %p322 = scmp.gt.s32.totalorder %s321, 0
        %s323 = scalar_select %p322, %s321, 0
        %p324 = scmp.lt.s32.totalorder %s323, 63
        %s325 = scalar_select %p324, %s323, 63
        %s326 = scalar_lea.vmem %s2, %s325
        %s327 = scalar_lea.vmem [#allocation2], 2
        %s328 = scalar_lea.sflag [#allocation3], 2
        // Predicated region
        $region93: #{tpu_custom_call.1} parent=31 // pred_check
          _
        $region94: #{tpu_custom_call.1} parent=31 // pred_check_branch
          %330 = sbr.rel target = $region96
        $region95: #{tpu_custom_call.1} parent=31 // pred_region
          // Predicated region
          $region108: #{tpu_custom_call.1} parent=95 // pred_check
            _
          $region109: #{tpu_custom_call.1} parent=95 // pred_check_branch
            %346 = sbr.rel (0) target = $region111
          $region110: #{tpu_custom_call.1} parent=95 // pred_region
            %s348 = ssub.s32 2, 1
            loop: start=0, step=1, limit=1
            $region112: #{tpu_custom_call.1} parent=110 // loop_pre_header
              _
            $region113: #{tpu_custom_call.1} parent=110 // loop_header
              %s350 = sphi 0, %s354
              %p351 = scmp.ge.s32.totalorder %s350, 1
              %s355 = sphi %s326, %s326
              %s356 = sphi %s327, %s327
            $region114: #{tpu_custom_call.1} parent=110 // loop_header_branch
              %353 = sbr.rel (%p351) target = $region118
            $region115: #{tpu_custom_call.1} parent=110 // loop_body
              %v357 = vld [vmem:[%s355] sm:%s348]
              %358 = vst [vmem:[%s356] sm:%s348] %v357
            $region116: #{tpu_custom_call.1} parent=110 // loop_footer
              %s354 = sadd.s32 1, %s350
            $region117: #{tpu_custom_call.1} parent=110 // loop_footer_branch
              %349 = sbr.rel target = $region113
            $region118: #{tpu_custom_call.1} parent=110 // loop_exit
              _
          $region111: #{tpu_custom_call.1} parent=95 // pred_fallthru
            _
        $region96: #{tpu_custom_call.1} parent=31 // pred_fallthru
          _
        // Predicated region
        $region97: #{tpu_custom_call.1} parent=31 // pred_check
          _
        $region98: #{tpu_custom_call.1} parent=31 // pred_check_branch
          %332 = sbr.rel (0) target = $region100
        $region99: #{tpu_custom_call.1} parent=31 // pred_region
          %s334 = ssub.s32 2, 1
          loop: start=0, step=1, limit=1
          $region101: #{tpu_custom_call.1} parent=99 // loop_pre_header
            _
          $region102: #{tpu_custom_call.1} parent=99 // loop_header
            %s336 = sphi 0, %s340
            %p337 = scmp.ge.s32.totalorder %s336, 1
            %s341 = sphi %s326, %s326
            %s342 = sphi %s327, %s327
          $region103: #{tpu_custom_call.1} parent=99 // loop_header_branch
            %339 = sbr.rel (%p337) target = $region107
          $region104: #{tpu_custom_call.1} parent=99 // loop_body
            %v343 = vld [vmem:[%s341] sm:%s334]
            %344 = vst [vmem:[%s342] sm:%s334] %v343
          $region105: #{tpu_custom_call.1} parent=99 // loop_footer
            %s340 = sadd.s32 1, %s336
          $region106: #{tpu_custom_call.1} parent=99 // loop_footer_branch
            %335 = sbr.rel target = $region102
          $region107: #{tpu_custom_call.1} parent=99 // loop_exit
            _
        $region100: #{tpu_custom_call.1} parent=31 // pred_fallthru
          _
        // Predicated region
        $region119: #{tpu_custom_call.1} parent=31 // pred_check
          _
        $region120: #{tpu_custom_call.1} parent=31 // pred_check_branch
          %361 = sbr.rel (0) target = $region122
        $region121: #{tpu_custom_call.1} parent=31 // pred_region
          %362 = vsyncadd %s328, 16
        $region122: #{tpu_custom_call.1} parent=31 // pred_fallthru
          _
        %s363 = sadd.s32 %s215, 3
        %s364 = sshra.s32 %s363, 7
        %s365 = sand.u32 %s363, 127
        %s366 = sadd.s32 %s364, %s32
        %s367 = smul.u32 %s366, 128
        %s368 = sshra.s32 %s363, 7
        %s369 = sand.u32 %s363, 127
        %s370 = sadd.s32 %s367, %s369
        %s371 = sld [smem:[#allocation5 + %s370]]
        %p372 = scmp.gt.s32.totalorder %s371, 0
        %s373 = scalar_select %p372, %s371, 0
        %p374 = scmp.lt.s32.totalorder %s373, 63
        %s375 = scalar_select %p374, %s373, 63
        %s376 = scalar_lea.vmem %s2, %s375
        %s377 = scalar_lea.vmem [#allocation2], 3
        %s378 = scalar_lea.sflag [#allocation3], 3
        // Predicated region
        $region123: #{tpu_custom_call.1} parent=31 // pred_check
          _
        $region124: #{tpu_custom_call.1} parent=31 // pred_check_branch
          %380 = sbr.rel target = $region126
        $region125: #{tpu_custom_call.1} parent=31 // pred_region
          // Predicated region
          $region138: #{tpu_custom_call.1} parent=125 // pred_check
            _
          $region139: #{tpu_custom_call.1} parent=125 // pred_check_branch
            %396 = sbr.rel (0) target = $region141
          $region140: #{tpu_custom_call.1} parent=125 // pred_region
            %s398 = ssub.s32 2, 1
            loop: start=0, step=1, limit=1
            $region142: #{tpu_custom_call.1} parent=140 // loop_pre_header
              _
            $region143: #{tpu_custom_call.1} parent=140 // loop_header
              %s400 = sphi 0, %s404
              %p401 = scmp.ge.s32.totalorder %s400, 1
              %s405 = sphi %s376, %s376
              %s406 = sphi %s377, %s377
            $region144: #{tpu_custom_call.1} parent=140 // loop_header_branch
              %403 = sbr.rel (%p401) target = $region148
            $region145: #{tpu_custom_call.1} parent=140 // loop_body
              %v407 = vld [vmem:[%s405] sm:%s398]
              %408 = vst [vmem:[%s406] sm:%s398] %v407
            $region146: #{tpu_custom_call.1} parent=140 // loop_footer
              %s404 = sadd.s32 1, %s400
            $region147: #{tpu_custom_call.1} parent=140 // loop_footer_branch
              %399 = sbr.rel target = $region143
            $region148: #{tpu_custom_call.1} parent=140 // loop_exit
              _
          $region141: #{tpu_custom_call.1} parent=125 // pred_fallthru
            _
        $region126: #{tpu_custom_call.1} parent=31 // pred_fallthru
          _
        // Predicated region
        $region127: #{tpu_custom_call.1} parent=31 // pred_check
          _
        $region128: #{tpu_custom_call.1} parent=31 // pred_check_branch
          %382 = sbr.rel (0) target = $region130
        $region129: #{tpu_custom_call.1} parent=31 // pred_region
          %s384 = ssub.s32 2, 1
          loop: start=0, step=1, limit=1
          $region131: #{tpu_custom_call.1} parent=129 // loop_pre_header
            _
          $region132: #{tpu_custom_call.1} parent=129 // loop_header
            %s386 = sphi 0, %s390
            %p387 = scmp.ge.s32.totalorder %s386, 1
            %s391 = sphi %s376, %s376
            %s392 = sphi %s377, %s377
          $region133: #{tpu_custom_call.1} parent=129 // loop_header_branch
            %389 = sbr.rel (%p387) target = $region137
          $region134: #{tpu_custom_call.1} parent=129 // loop_body
            %v393 = vld [vmem:[%s391] sm:%s384]
            %394 = vst [vmem:[%s392] sm:%s384] %v393
          $region135: #{tpu_custom_call.1} parent=129 // loop_footer
            %s390 = sadd.s32 1, %s386
          $region136: #{tpu_custom_call.1} parent=129 // loop_footer_branch
            %385 = sbr.rel target = $region132
          $region137: #{tpu_custom_call.1} parent=129 // loop_exit
            _
        $region130: #{tpu_custom_call.1} parent=31 // pred_fallthru
          _
        // Predicated region
        $region149: #{tpu_custom_call.1} parent=31 // pred_check
          _
        $region150: #{tpu_custom_call.1} parent=31 // pred_check_branch
          %411 = sbr.rel (0) target = $region152
        $region151: #{tpu_custom_call.1} parent=31 // pred_region
          %412 = vsyncadd %s378, 16
        $region152: #{tpu_custom_call.1} parent=31 // pred_fallthru
          _
        %s413 = sadd.s32 %s215, 4
        %s414 = sshra.s32 %s413, 7
        %s415 = sand.u32 %s413, 127
        %s416 = sadd.s32 %s414, %s32
        %s417 = smul.u32 %s416, 128
        %s418 = sshra.s32 %s413, 7
        %s419 = sand.u32 %s413, 127
        %s420 = sadd.s32 %s417, %s419
        %s421 = sld [smem:[#allocation5 + %s420]]
        %p422 = scmp.gt.s32.totalorder %s421, 0
        %s423 = scalar_select %p422, %s421, 0
        %p424 = scmp.lt.s32.totalorder %s423, 63
        %s425 = scalar_select %p424, %s423, 63
        %s426 = scalar_lea.vmem %s2, %s425
        %s427 = scalar_lea.vmem [#allocation2], 4
        %s428 = scalar_lea.sflag [#allocation3], 4
        // Predicated region
        $region153: #{tpu_custom_call.1} parent=31 // pred_check
          _
        $region154: #{tpu_custom_call.1} parent=31 // pred_check_branch
          %430 = sbr.rel target = $region156
        $region155: #{tpu_custom_call.1} parent=31 // pred_region
          // Predicated region
          $region168: #{tpu_custom_call.1} parent=155 // pred_check
            _
          $region169: #{tpu_custom_call.1} parent=155 // pred_check_branch
            %446 = sbr.rel (0) target = $region171
          $region170: #{tpu_custom_call.1} parent=155 // pred_region
            %s448 = ssub.s32 2, 1
            loop: start=0, step=1, limit=1
            $region172: #{tpu_custom_call.1} parent=170 // loop_pre_header
              _
            $region173: #{tpu_custom_call.1} parent=170 // loop_header
              %s450 = sphi 0, %s454
              %p451 = scmp.ge.s32.totalorder %s450, 1
              %s455 = sphi %s426, %s426
              %s456 = sphi %s427, %s427
            $region174: #{tpu_custom_call.1} parent=170 // loop_header_branch
              %453 = sbr.rel (%p451) target = $region178
            $region175: #{tpu_custom_call.1} parent=170 // loop_body
              %v457 = vld [vmem:[%s455] sm:%s448]
              %458 = vst [vmem:[%s456] sm:%s448] %v457
            $region176: #{tpu_custom_call.1} parent=170 // loop_footer
              %s454 = sadd.s32 1, %s450
            $region177: #{tpu_custom_call.1} parent=170 // loop_footer_branch
              %449 = sbr.rel target = $region173
            $region178: #{tpu_custom_call.1} parent=170 // loop_exit
              _
          $region171: #{tpu_custom_call.1} parent=155 // pred_fallthru
            _
        $region156: #{tpu_custom_call.1} parent=31 // pred_fallthru
          _
        // Predicated region
        $region157: #{tpu_custom_call.1} parent=31 // pred_check
          _
        $region158: #{tpu_custom_call.1} parent=31 // pred_check_branch
          %432 = sbr.rel (0) target = $region160
        $region159: #{tpu_custom_call.1} parent=31 // pred_region
          %s434 = ssub.s32 2, 1
          loop: start=0, step=1, limit=1
          $region161: #{tpu_custom_call.1} parent=159 // loop_pre_header
            _
          $region162: #{tpu_custom_call.1} parent=159 // loop_header
            %s436 = sphi 0, %s440
            %p437 = scmp.ge.s32.totalorder %s436, 1
            %s441 = sphi %s426, %s426
            %s442 = sphi %s427, %s427
          $region163: #{tpu_custom_call.1} parent=159 // loop_header_branch
            %439 = sbr.rel (%p437) target = $region167
          $region164: #{tpu_custom_call.1} parent=159 // loop_body
            %v443 = vld [vmem:[%s441] sm:%s434]
            %444 = vst [vmem:[%s442] sm:%s434] %v443
          $region165: #{tpu_custom_call.1} parent=159 // loop_footer
            %s440 = sadd.s32 1, %s436
          $region166: #{tpu_custom_call.1} parent=159 // loop_footer_branch
            %435 = sbr.rel target = $region162
          $region167: #{tpu_custom_call.1} parent=159 // loop_exit
            _
        $region160: #{tpu_custom_call.1} parent=31 // pred_fallthru
          _
        // Predicated region
        $region179: #{tpu_custom_call.1} parent=31 // pred_check
          _
        $region180: #{tpu_custom_call.1} parent=31 // pred_check_branch
          %461 = sbr.rel (0) target = $region182
        $region181: #{tpu_custom_call.1} parent=31 // pred_region
          %462 = vsyncadd %s428, 16
        $region182: #{tpu_custom_call.1} parent=31 // pred_fallthru
          _
        %s463 = sadd.s32 %s215, 5
        %s464 = sshra.s32 %s463, 7
        %s465 = sand.u32 %s463, 127
        %s466 = sadd.s32 %s464, %s32
        %s467 = smul.u32 %s466, 128
        %s468 = sshra.s32 %s463, 7
        %s469 = sand.u32 %s463, 127
        %s470 = sadd.s32 %s467, %s469
        %s471 = sld [smem:[#allocation5 + %s470]]
        %p472 = scmp.gt.s32.totalorder %s471, 0
        %s473 = scalar_select %p472, %s471, 0
        %p474 = scmp.lt.s32.totalorder %s473, 63
        %s475 = scalar_select %p474, %s473, 63
        %s476 = scalar_lea.vmem %s2, %s475
        %s477 = scalar_lea.vmem [#allocation2], 5
        %s478 = scalar_lea.sflag [#allocation3], 5
        // Predicated region
        $region183: #{tpu_custom_call.1} parent=31 // pred_check
          _
        $region184: #{tpu_custom_call.1} parent=31 // pred_check_branch
          %480 = sbr.rel target = $region186
        $region185: #{tpu_custom_call.1} parent=31 // pred_region
          // Predicated region
          $region198: #{tpu_custom_call.1} parent=185 // pred_check
            _
          $region199: #{tpu_custom_call.1} parent=185 // pred_check_branch
            %496 = sbr.rel (0) target = $region201
          $region200: #{tpu_custom_call.1} parent=185 // pred_region
            %s498 = ssub.s32 2, 1
            loop: start=0, step=1, limit=1
            $region202: #{tpu_custom_call.1} parent=200 // loop_pre_header
              _
            $region203: #{tpu_custom_call.1} parent=200 // loop_header
              %s500 = sphi 0, %s504
              %p501 = scmp.ge.s32.totalorder %s500, 1
              %s505 = sphi %s476, %s476
              %s506 = sphi %s477, %s477
            $region204: #{tpu_custom_call.1} parent=200 // loop_header_branch
              %503 = sbr.rel (%p501) target = $region208
            $region205: #{tpu_custom_call.1} parent=200 // loop_body
              %v507 = vld [vmem:[%s505] sm:%s498]
              %508 = vst [vmem:[%s506] sm:%s498] %v507
            $region206: #{tpu_custom_call.1} parent=200 // loop_footer
              %s504 = sadd.s32 1, %s500
            $region207: #{tpu_custom_call.1} parent=200 // loop_footer_branch
              %499 = sbr.rel target = $region203
            $region208: #{tpu_custom_call.1} parent=200 // loop_exit
              _
          $region201: #{tpu_custom_call.1} parent=185 // pred_fallthru
            _
        $region186: #{tpu_custom_call.1} parent=31 // pred_fallthru
          _
        // Predicated region
        $region187: #{tpu_custom_call.1} parent=31 // pred_check
          _
        $region188: #{tpu_custom_call.1} parent=31 // pred_check_branch
          %482 = sbr.rel (0) target = $region190
        $region189: #{tpu_custom_call.1} parent=31 // pred_region
          %s484 = ssub.s32 2, 1
          loop: start=0, step=1, limit=1
          $region191: #{tpu_custom_call.1} parent=189 // loop_pre_header
            _
          $region192: #{tpu_custom_call.1} parent=189 // loop_header
            %s486 = sphi 0, %s490
            %p487 = scmp.ge.s32.totalorder %s486, 1
            %s491 = sphi %s476, %s476
            %s492 = sphi %s477, %s477
          $region193: #{tpu_custom_call.1} parent=189 // loop_header_branch
            %489 = sbr.rel (%p487) target = $region197
          $region194: #{tpu_custom_call.1} parent=189 // loop_body
            %v493 = vld [vmem:[%s491] sm:%s484]
            %494 = vst [vmem:[%s492] sm:%s484] %v493
          $region195: #{tpu_custom_call.1} parent=189 // loop_footer
            %s490 = sadd.s32 1, %s486
          $region196: #{tpu_custom_call.1} parent=189 // loop_footer_branch
            %485 = sbr.rel target = $region192
          $region197: #{tpu_custom_call.1} parent=189 // loop_exit
            _
        $region190: #{tpu_custom_call.1} parent=31 // pred_fallthru
          _
        // Predicated region
        $region209: #{tpu_custom_call.1} parent=31 // pred_check
          _
        $region210: #{tpu_custom_call.1} parent=31 // pred_check_branch
          %511 = sbr.rel (0) target = $region212
        $region211: #{tpu_custom_call.1} parent=31 // pred_region
          %512 = vsyncadd %s478, 16
        $region212: #{tpu_custom_call.1} parent=31 // pred_fallthru
          _
        %s513 = sadd.s32 %s215, 6
        %s514 = sshra.s32 %s513, 7
        %s515 = sand.u32 %s513, 127
        %s516 = sadd.s32 %s514, %s32
        %s517 = smul.u32 %s516, 128
        %s518 = sshra.s32 %s513, 7
        %s519 = sand.u32 %s513, 127
        %s520 = sadd.s32 %s517, %s519
        %s521 = sld [smem:[#allocation5 + %s520]]
        %p522 = scmp.gt.s32.totalorder %s521, 0
        %s523 = scalar_select %p522, %s521, 0
        %p524 = scmp.lt.s32.totalorder %s523, 63
        %s525 = scalar_select %p524, %s523, 63
        %s526 = scalar_lea.vmem %s2, %s525
        %s527 = scalar_lea.vmem [#allocation2], 6
        %s528 = scalar_lea.sflag [#allocation3], 6
        // Predicated region
        $region213: #{tpu_custom_call.1} parent=31 // pred_check
          _
        $region214: #{tpu_custom_call.1} parent=31 // pred_check_branch
          %530 = sbr.rel target = $region216
        $region215: #{tpu_custom_call.1} parent=31 // pred_region
          // Predicated region
          $region228: #{tpu_custom_call.1} parent=215 // pred_check
            _
          $region229: #{tpu_custom_call.1} parent=215 // pred_check_branch
            %546 = sbr.rel (0) target = $region231
          $region230: #{tpu_custom_call.1} parent=215 // pred_region
            %s548 = ssub.s32 2, 1
            loop: start=0, step=1, limit=1
            $region232: #{tpu_custom_call.1} parent=230 // loop_pre_header
              _
            $region233: #{tpu_custom_call.1} parent=230 // loop_header
              %s550 = sphi 0, %s554
              %p551 = scmp.ge.s32.totalorder %s550, 1
              %s555 = sphi %s526, %s526
              %s556 = sphi %s527, %s527
            $region234: #{tpu_custom_call.1} parent=230 // loop_header_branch
              %553 = sbr.rel (%p551) target = $region238
            $region235: #{tpu_custom_call.1} parent=230 // loop_body
              %v557 = vld [vmem:[%s555] sm:%s548]
              %558 = vst [vmem:[%s556] sm:%s548] %v557
            $region236: #{tpu_custom_call.1} parent=230 // loop_footer
              %s554 = sadd.s32 1, %s550
            $region237: #{tpu_custom_call.1} parent=230 // loop_footer_branch
              %549 = sbr.rel target = $region233
            $region238: #{tpu_custom_call.1} parent=230 // loop_exit
              _
          $region231: #{tpu_custom_call.1} parent=215 // pred_fallthru
            _
        $region216: #{tpu_custom_call.1} parent=31 // pred_fallthru
          _
        // Predicated region
        $region217: #{tpu_custom_call.1} parent=31 // pred_check
          _
        $region218: #{tpu_custom_call.1} parent=31 // pred_check_branch
          %532 = sbr.rel (0) target = $region220
        $region219: #{tpu_custom_call.1} parent=31 // pred_region
          %s534 = ssub.s32 2, 1
          loop: start=0, step=1, limit=1
          $region221: #{tpu_custom_call.1} parent=219 // loop_pre_header
            _
          $region222: #{tpu_custom_call.1} parent=219 // loop_header
            %s536 = sphi 0, %s540
            %p537 = scmp.ge.s32.totalorder %s536, 1
            %s541 = sphi %s526, %s526
            %s542 = sphi %s527, %s527
          $region223: #{tpu_custom_call.1} parent=219 // loop_header_branch
            %539 = sbr.rel (%p537) target = $region227
          $region224: #{tpu_custom_call.1} parent=219 // loop_body
            %v543 = vld [vmem:[%s541] sm:%s534]
            %544 = vst [vmem:[%s542] sm:%s534] %v543
          $region225: #{tpu_custom_call.1} parent=219 // loop_footer
            %s540 = sadd.s32 1, %s536
          $region226: #{tpu_custom_call.1} parent=219 // loop_footer_branch
            %535 = sbr.rel target = $region222
          $region227: #{tpu_custom_call.1} parent=219 // loop_exit
            _
        $region220: #{tpu_custom_call.1} parent=31 // pred_fallthru
          _
        // Predicated region
        $region239: #{tpu_custom_call.1} parent=31 // pred_check
          _
        $region240: #{tpu_custom_call.1} parent=31 // pred_check_branch
          %561 = sbr.rel (0) target = $region242
        $region241: #{tpu_custom_call.1} parent=31 // pred_region
          %562 = vsyncadd %s528, 16
        $region242: #{tpu_custom_call.1} parent=31 // pred_fallthru
          _
        %s563 = sadd.s32 %s215, 7
        %s564 = sshra.s32 %s563, 7
        %s565 = sand.u32 %s563, 127
        %s566 = sadd.s32 %s564, %s32
        %s567 = smul.u32 %s566, 128
        %s568 = sshra.s32 %s563, 7
        %s569 = sand.u32 %s563, 127
        %s570 = sadd.s32 %s567, %s569
        %s571 = sld [smem:[#allocation5 + %s570]]
        %p572 = scmp.gt.s32.totalorder %s571, 0
        %s573 = scalar_select %p572, %s571, 0
        %p574 = scmp.lt.s32.totalorder %s573, 63
        %s575 = scalar_select %p574, %s573, 63
        %s576 = scalar_lea.vmem %s2, %s575
        %s577 = scalar_lea.vmem [#allocation2], 7
        %s578 = scalar_lea.sflag [#allocation3], 7
        // Predicated region
        $region243: #{tpu_custom_call.1} parent=31 // pred_check
          _
        $region244: #{tpu_custom_call.1} parent=31 // pred_check_branch
          %580 = sbr.rel target = $region246
        $region245: #{tpu_custom_call.1} parent=31 // pred_region
          // Predicated region
          $region258: #{tpu_custom_call.1} parent=245 // pred_check
            _
          $region259: #{tpu_custom_call.1} parent=245 // pred_check_branch
            %596 = sbr.rel (0) target = $region261
          $region260: #{tpu_custom_call.1} parent=245 // pred_region
            %s598 = ssub.s32 2, 1
            loop: start=0, step=1, limit=1
            $region262: #{tpu_custom_call.1} parent=260 // loop_pre_header
              _
            $region263: #{tpu_custom_call.1} parent=260 // loop_header
              %s600 = sphi 0, %s604
              %p601 = scmp.ge.s32.totalorder %s600, 1
              %s605 = sphi %s576, %s576
              %s606 = sphi %s577, %s577
            $region264: #{tpu_custom_call.1} parent=260 // loop_header_branch
              %603 = sbr.rel (%p601) target = $region268
            $region265: #{tpu_custom_call.1} parent=260 // loop_body
              %v607 = vld [vmem:[%s605] sm:%s598]
              %608 = vst [vmem:[%s606] sm:%s598] %v607
            $region266: #{tpu_custom_call.1} parent=260 // loop_footer
              %s604 = sadd.s32 1, %s600
            $region267: #{tpu_custom_call.1} parent=260 // loop_footer_branch
              %599 = sbr.rel target = $region263
            $region268: #{tpu_custom_call.1} parent=260 // loop_exit
              _
          $region261: #{tpu_custom_call.1} parent=245 // pred_fallthru
            _
        $region246: #{tpu_custom_call.1} parent=31 // pred_fallthru
          _
        // Predicated region
        $region247: #{tpu_custom_call.1} parent=31 // pred_check
          _
        $region248: #{tpu_custom_call.1} parent=31 // pred_check_branch
          %582 = sbr.rel (0) target = $region250
        $region249: #{tpu_custom_call.1} parent=31 // pred_region
          %s584 = ssub.s32 2, 1
          loop: start=0, step=1, limit=1
          $region251: #{tpu_custom_call.1} parent=249 // loop_pre_header
            _
          $region252: #{tpu_custom_call.1} parent=249 // loop_header
            %s586 = sphi 0, %s590
            %p587 = scmp.ge.s32.totalorder %s586, 1
            %s591 = sphi %s576, %s576
            %s592 = sphi %s577, %s577
          $region253: #{tpu_custom_call.1} parent=249 // loop_header_branch
            %589 = sbr.rel (%p587) target = $region257
          $region254: #{tpu_custom_call.1} parent=249 // loop_body
            %v593 = vld [vmem:[%s591] sm:%s584]
            %594 = vst [vmem:[%s592] sm:%s584] %v593
          $region255: #{tpu_custom_call.1} parent=249 // loop_footer
            %s590 = sadd.s32 1, %s586
          $region256: #{tpu_custom_call.1} parent=249 // loop_footer_branch
            %585 = sbr.rel target = $region252
          $region257: #{tpu_custom_call.1} parent=249 // loop_exit
            _
        $region250: #{tpu_custom_call.1} parent=31 // pred_fallthru
          _
        // Predicated region
        $region269: #{tpu_custom_call.1} parent=31 // pred_check
          _
        $region270: #{tpu_custom_call.1} parent=31 // pred_check_branch
          %611 = sbr.rel (0) target = $region272
        $region271: #{tpu_custom_call.1} parent=31 // pred_region
          %612 = vsyncadd %s578, 16
        $region272: #{tpu_custom_call.1} parent=31 // pred_fallthru
          _
        %v613 = vld [vmem:[%s208] sm:$0xff]
        %v614 = vld [vmem:[%s213] sm:$0xff]
        %v615 = vld [vmem:[%s3] sm:$0x1]
        %vm616 = vcmp.eq.s32.totalorder %v613, 0
        %v617 = vsel %vm616, 1, 0
        %618 = vset.pattern.permute.xlu0 0
        %619 = vperm.xlu0 %618, %v617
        %v620 = vpop.permute.xlu0 %619
        %vm621 = vcmp.eq.s32.totalorder %v620, 1
        %v622 = vperm.slane %v615, 0
        %v623 = vsel %vm621, %v622, 0.0
        %v624 = vadd.f32 %v614, %v623
        %v625 = vld [vmem:[%s3 + $0x1] sm:$0x1]
        %vm626 = vcmp.eq.s32.totalorder %v613, 1
        %v627 = vsel %vm626, 1, 0
        %628 = vset.pattern.permute.xlu0 0
        %629 = vperm.xlu0 %628, %v627
        %v630 = vpop.permute.xlu0 %629
        %vm631 = vcmp.eq.s32.totalorder %v630, 1
        %v632 = vperm.slane %v625, 0
        %v633 = vsel %vm631, %v632, 0.0
        %v634 = vadd.f32 %v624, %v633
        %v635 = vld [vmem:[%s3 + $0x2] sm:$0x1]
        %vm636 = vcmp.eq.s32.totalorder %v613, 2
        %v637 = vsel %vm636, 1, 0
        %638 = vset.pattern.permute.xlu0 0
        %639 = vperm.xlu0 %638, %v637
        %v640 = vpop.permute.xlu0 %639
        %vm641 = vcmp.eq.s32.totalorder %v640, 1
        %v642 = vperm.slane %v635, 0
        %v643 = vsel %vm641, %v642, 0.0
        %v644 = vadd.f32 %v634, %v643
        %s645 = smul.u32 1, 1
        %s646 = sshll.u32 %s645, 4
        %647 = dma.done [#allocation3], %s646
        %s648 = sshll.u32 %s645, 4
        %649 = dma.done %s278, %s648
        %s650 = sshll.u32 %s645, 4
        %651 = dma.done %s328, %s650
        %s652 = sshll.u32 %s645, 4
        %653 = dma.done %s378, %s652
        %s654 = sshll.u32 %s645, 4
        %655 = dma.done %s428, %s654
        %s656 = sshll.u32 %s645, 4
        %657 = dma.done %s478, %s656
        %s658 = sshll.u32 %s645, 4
        %659 = dma.done %s528, %s658
        %s660 = sshll.u32 %s645, 4
        %661 = dma.done %s578, %s660
        %v662 = vld [vmem:[#allocation2] sm:$0xff]
        %v663 = vadd.f32 %v662, %v644
        %vm664 = vcmask 261120
        %665 = vst.msk [vmem:[%s203] sm:$0xff] %vm664, %v663
        %s666 = sand.u32 %s124, 1
        %s667 = scalar_lea.sflag [#allocation7], %s666
        %s668 = sand.u32 %s124, 1
        %s669 = smul.addr %s668, 8
        %s670 = scalar_lea.vmem [#allocation6], %s669
        // Predicated region
        $region273: #{tpu_custom_call.1} parent=31 // pred_check
          %p671 = pneg %p134
        $region274: #{tpu_custom_call.1} parent=31 // pred_check_branch
          %673 = sbr.rel (%p671) target = $region276
        $region275: #{tpu_custom_call.1} parent=31 // pred_region
          %s674 = sadd.s32 %s32, %s31
          %676 = vsyncadd %s667, 0
          %s677 = smul.addr %s674, 8
          %s678 = scalar_lea.hbm %s5, %s677
          %s680 = sshll.u32 %s670, 4
          %s681 = int_to_ptr.vmem [resolvable:$true] %s680
          %s682 = sshll.u32 %s678, 4
          %s683 = int_to_ptr.hbm [resolvable:$true] %s682
          %685 = dma.vmem_to_hbm [thread:$0]  %s681, 128, %s683, %s667
        $region276: #{tpu_custom_call.1} parent=31 // pred_fallthru
          _
      $region32: #{tpu_custom_call.1} parent=5 // pred_fallthru
        _
      %p686 = scmp.le.s32.totalorder 2, %s22
      // Predicated region
      $region277: #{tpu_custom_call.1} parent=5 // pred_check
        %p687 = pneg %p686
      $region278: #{tpu_custom_call.1} parent=5 // pred_check_branch
        %689 = sbr.rel (%p687) target = $region280
      $region279: #{tpu_custom_call.1} parent=5 // pred_region
        %s690 = ssub.s32 %s22, 2
        // Predicated region
        $region281: #{tpu_custom_call.1} parent=279 // pred_check
          %p691 = pneg %p140
        $region282: #{tpu_custom_call.1} parent=279 // pred_check_branch
          %693 = sbr.rel (%p691) target = $region284
        $region283: #{tpu_custom_call.1} parent=279 // pred_region
          %s694 = sand.u32 %s125, 1
          %s695 = scalar_lea.sflag [#allocation7], %s694
          %s696 = sand.u32 %s125, 1
          %s697 = smul.addr %s696, 8
          %s698 = scalar_lea.vmem [#allocation6], %s697
          %700 = dma.done %s695, 128
        $region284: #{tpu_custom_call.1} parent=279 // pred_fallthru
          _
      $region280: #{tpu_custom_call.1} parent=5 // pred_fallthru
        _
    $region6: #{tpu_custom_call.1} parent=1 // loop_footer
      %s26 = sadd.s32 1, %s22
    $region7: #{tpu_custom_call.1} parent=1 // loop_footer_branch
      %21 = sbr.rel target = $region3
    $region8: #{tpu_custom_call.1} parent=1 // loop_exit
      _
    %701 = vsyncpa [#allocation7], 1
    %s702 = scalar_lea.sflag [#allocation7], 1
    %703 = vsyncpa %s702, 1
  %704 = vsyncmov [#allocation3]
  %s705 = vpop.sfrf %704
  %p706 = scmp.eq.s32.totalorder %s705, 0
  %p707 = pneg %p706
  %709 = shalt.err (%p707)
  %s710 = scalar_lea.sflag [#allocation3], 1
  %711 = vsyncmov %s710
  %s712 = vpop.sfrf %711
  %p713 = scmp.eq.s32.totalorder %s712, 0
  %p714 = pneg %p713
  %716 = shalt.err (%p714)
  %s717 = scalar_lea.sflag [#allocation3], 2
  %718 = vsyncmov %s717
  %s719 = vpop.sfrf %718
  %p720 = scmp.eq.s32.totalorder %s719, 0
  %p721 = pneg %p720
  %723 = shalt.err (%p721)
  %s724 = scalar_lea.sflag [#allocation3], 3
  %725 = vsyncmov %s724
  %s726 = vpop.sfrf %725
  %p727 = scmp.eq.s32.totalorder %s726, 0
  %p728 = pneg %p727
  %730 = shalt.err (%p728)
  %s731 = scalar_lea.sflag [#allocation3], 4
  %732 = vsyncmov %s731
  %s733 = vpop.sfrf %732
  %p734 = scmp.eq.s32.totalorder %s733, 0
  %p735 = pneg %p734
  %737 = shalt.err (%p735)
  %s738 = scalar_lea.sflag [#allocation3], 5
  %739 = vsyncmov %s738
  %s740 = vpop.sfrf %739
  %p741 = scmp.eq.s32.totalorder %s740, 0
  %p742 = pneg %p741
  %744 = shalt.err (%p742)
  %s745 = scalar_lea.sflag [#allocation3], 6
  %746 = vsyncmov %s745
  %s747 = vpop.sfrf %746
  %p748 = scmp.eq.s32.totalorder %s747, 0
  %p749 = pneg %p748
  %751 = shalt.err (%p749)
  %s752 = scalar_lea.sflag [#allocation3], 7
  %753 = vsyncmov %s752
  %s754 = vpop.sfrf %753
  %p755 = scmp.eq.s32.totalorder %s754, 0
  %p756 = pneg %p755
  %758 = shalt.err (%p756)

</llo_original>
